<compile_context>
chip_gen: v7x
topology: tpu7x:2x2x1
jax: 0.10.0
libtpu: 0.0.40
codegen_flags: <defaults>
</compile_context>

<pallas_src>
import functools
import itertools
import math
from types import SimpleNamespace

import numpy as np
import jax
import jax.numpy as jnp
from jax.experimental import pallas as pl
from jax.experimental.pallas import tpu as pltpu

EPS = 1e-8


# ----------------------------------------------------------------------------
# small helpers
# ----------------------------------------------------------------------------
def reweight_weights(w):
    w = np.asarray(w, np.float64)
    return w / w.sum()


def _mixture_selection_ranges(w, num_samples):
    """Static per-joint-subset row ranges matching utils.mixture_component_selection."""
    S = len(w)
    starts, ends = [], []
    for k in range(S):
        i_start = 0 if k == 0 else ends[k - 1]
        if k == S - 1:
            i_end = num_samples
        else:
            i_end = i_start + int(math.floor(num_samples * float(w[k])))
        starts.append(i_start)
        ends.append(i_end)
    ends[-1] = num_samples
    return list(zip(starts, ends))


def _fast_recip(x):
    """1/x via EUP approximate reciprocal + one Newton step (moves divides off the
    VALU slots; exact enough here because logvars are tanh-bounded)."""
    r = pl.reciprocal(x, approx=True)
    return r * (2.0 - x * r)


# ----------------------------------------------------------------------------
# fused Pallas kernel: encode + subset PoE + joint selection + reparam + divergence
# ----------------------------------------------------------------------------
def _fused_mmvae_kernel(x_ref, wenc_ref, memb_ref, ksum_ref, w_ref, eps_ref,
                        emu_ref, elv_ref, smu_ref, slv_ref,
                        jmu_ref, jlv_ref, z_ref, klds_ref, jd_ref,
                        *, class_dim, num_mods, sel_ranges, prior_prec, norm):
    """Single-launch multimodal latent fusion (all f32).

      x_ref    : (M, B, F)     raw modality inputs
      wenc_ref : (M, F, 2D)    packed encoder weights (Wmu | Wlogvar)
      memb_ref : (M, D, S*D)   kron(membership row, I_D) -> per-subset sums as matmuls
      ksum_ref : (S*D, Sj)     KL block-column-sum + joint-subset selection matrix
      w_ref    : (1, Sj)       divergence weights
      eps_ref  : (B, D)        N(0,1) noise for reparameterization
      emu/elv  : (B, M*D)      per-modality encodings
      smu/slv  : (B, S*D)      PoE-fused distribution per available subset (lane blocks)
      jmu/jlv/z: (B, D)        joint distribution + latent sample
      klds_ref : (1, Sj)       per-subset KL(q || N(0,I)) / norm  (lane-major)
      jd_ref   : (1, 1)        weighted joint divergence
    """
    D = class_dim
    sum_t = None     # (B, S*D) per-subset precision sums
    sum_wm = None    # (B, S*D) per-subset precision-weighted mean sums

    # --- fused encoder + expert statistics (static unroll over modalities) --------
    for m in range(num_mods):
        y = jnp.dot(x_ref[m], wenc_ref[m], preferred_element_type=jnp.float32)  # (B, 2D)
        mu_m = y[:, :D]
        lv_m = jnp.tanh(y[:, D:])                       # bounded logvars
        emu_ref[:, m * D:(m + 1) * D] = mu_m
        elv_ref[:, m * D:(m + 1) * D] = lv_m
        # utils.poe: var = exp(logvar) + EPS ; T = 1/(var + EPS)   (EPS added twice,
        # intentionally matching the original utils.poe semantics)
        prec_m = _fast_recip(jnp.exp(lv_m) + 2.0 * EPS)
        wmu_m = mu_m * prec_m
        r_m = memb_ref[m]                               # (D, S*D)
        t_c = jnp.dot(prec_m, r_m, preferred_element_type=jnp.float32)
        w_c = jnp.dot(wmu_m, r_m, preferred_element_type=jnp.float32)
        sum_t = t_c if sum_t is None else sum_t + t_c
        sum_wm = w_c if sum_wm is None else sum_wm + w_c

    # modality_poe: poe_fusion adds a N(0, I) prior expert to every subset; its
    # precision contribution is the constant 1/(1 + 2*EPS), its mean contribution 0.
    if prior_prec != 0.0:
        sum_t = sum_t + prior_prec

    # --- product of experts for every available subset, on the full slab ----------
    pd_var = _fast_recip(sum_t)                         # (B, S*D)
    pd_mu = sum_wm * pd_var
    pd_lv = jnp.log(pd_var + EPS)
    smu_ref[...] = pd_mu
    slv_ref[...] = pd_lv

    # --- joint distribution: static mixture-component selection + reparameterize --
    # (selection is fully static -> copy static row-range x lane-block slices)
    for (r0, r1, p) in sel_ranges:
        mu_blk = pd_mu[r0:r1, p * D:(p + 1) * D]
        lv_blk = pd_lv[r0:r1, p * D:(p + 1) * D]
        jmu_ref[r0:r1, :] = mu_blk
        jlv_ref[r0:r1, :] = lv_blk
        z_ref[r0:r1, :] = mu_blk + eps_ref[r0:r1, :] * jnp.exp(0.5 * lv_blk)

    # --- per-subset KL(q || N(0,I)) + weighted joint divergence, one reduction -----
    # exp(pd_lv) == pd_var + EPS exactly, so reuse it (saves EUP exp passes).
    term = 1.0 + pd_lv - (pd_var + EPS) - pd_mu * pd_mu                # (B, S*D)
    klds_b = jnp.dot(term, ksum_ref[...], preferred_element_type=jnp.float32)  # (B, Sj)
    klds = (-0.5 / norm) * jnp.sum(klds_b, axis=0, keepdims=True)      # (1, Sj)
    klds_ref[...] = klds
    jd_ref[...] = jnp.sum(w_ref[...] * klds, axis=-1, keepdims=True)   # (1, 1)


def _build_fused_pallas_call(*, M, B, F, D, S, Sj, sel_ranges, prior_prec, norm):
    kernel = functools.partial(
        _fused_mmvae_kernel, class_dim=D, num_mods=M,
        sel_ranges=tuple(sel_ranges), prior_prec=float(prior_prec), norm=float(norm))

    in_shapes = [(M, B, F), (M, F, 2 * D), (M, D, S * D), (S * D, Sj), (1, Sj), (B, D)]
    out_shape = (
        jax.ShapeDtypeStruct((B, M * D), jnp.float32),   # per-modality mus
        jax.ShapeDtypeStruct((B, M * D), jnp.float32),   # per-modality logvars
        jax.ShapeDtypeStruct((B, S * D), jnp.float32),   # subset PoE mus
        jax.ShapeDtypeStruct((B, S * D), jnp.float32),   # subset PoE logvars
        jax.ShapeDtypeStruct((B, D), jnp.float32),       # joint mu
        jax.ShapeDtypeStruct((B, D), jnp.float32),       # joint logvar
        jax.ShapeDtypeStruct((B, D), jnp.float32),       # reparameterized z
        jax.ShapeDtypeStruct((1, Sj), jnp.float32),      # individual KL divergences
        jax.ShapeDtypeStruct((1, 1), jnp.float32),       # weighted joint divergence
    )
    return pl.pallas_call(
        kernel,
        grid=(1,),
        in_specs=[pl.BlockSpec(s, (lambda i, n=len(s): (0,) * n)) for s in in_shapes],
        out_specs=tuple(pl.BlockSpec(o.shape, (lambda i, n=len(o.shape): (0,) * n))
                        for o in out_shape),
        out_shape=out_shape,
        compiler_params=pltpu.CompilerParams(dimension_semantics=("arbitrary",)),
    )


# ----------------------------------------------------------------------------
# BaseMMVae port (joint_elbo / modality_poe configurations)
# ----------------------------------------------------------------------------
class BaseMMVaePallas:
    def __init__(self, flags, modalities, subsets, enc_params):
        self.flags = flags
        self.modalities = modalities
        self.subsets = subsets
        self.num_modalities = len(modalities)
        self.mod_names = list(modalities.keys())
        self.weights = reweight_weights(flags.alpha_modalities)
        # Pack (Wm | Wl) -> (F, 2D) so each modality encodes with one matmul.
        self.enc_w = {
            name: jnp.concatenate([jnp.asarray(Wm, jnp.float32),
                                   jnp.asarray(Wl, jnp.float32)], axis=1)
            for name, (Wm, Wl) in enc_params.items()
        }
        self.set_fusion_functions()
        self._configs = {}   # cached static structure + jitted forward per present-set

    # --- fusion configuration (mirrors BaseMMVae.set_fusion_functions order) ----
    def set_fusion_functions(self):
        f = self.flags
        if f.modality_moe or f.modality_jsd:
            # TODO(synk): moe/jsd subset fusion (per-subset mixture selection / dynamic
            # prior) not ported; only PoE-based configurations are.
            raise NotImplementedError("only joint_elbo / modality_poe fusion implemented")
        elif f.modality_poe:
            self.fusion_condition = self.fusion_condition_poe
        elif f.joint_elbo:
            self.fusion_condition = self.fusion_condition_joint
        else:
            raise ValueError("no fusion configuration selected in flags")

    @staticmethod
    def fusion_condition_poe(subset, input_batch=None):
        return len(subset) == len(input_batch.keys())

    @staticmethod
    def fusion_condition_joint(subset, input_batch=None):
        return True

    # --- per-present-modality-set static config (built once, cached) --------------
    def _get_config(self, present):
        if present in self._configs:
            return self._configs[present]
        flags = self.flags
        D, B = flags.class_dim, flags.batch_size
        M = len(present)
        name_to_idx = {n: i for i, n in enumerate(present)}
        present_dict = dict.fromkeys(present)

        subset_keys, subset_members, joint_pos = [], [], []
        for s_key, mods in self.subsets.items():
            if s_key == '':
                continue
            if not all(m.name in name_to_idx for m in mods):
                continue
            if self.fusion_condition(mods, present_dict):
                joint_pos.append(len(subset_keys))
            subset_keys.append(s_key)
            subset_members.append(tuple(name_to_idx[m.name] for m in mods))
        S, Sj = len(subset_keys), len(joint_pos)

        # Static subset-membership matrix, Kronecker-expanded with I_D so per-subset
        # precision / weighted-mean sums become MXU matmuls on the (B, S*D) slab.
        memb = np.zeros((S, M), np.float32)
        for s, members in enumerate(subset_members):
            for m in members:
                memb[s, m] = 1.0
        memb_kron = np.einsum('sm,de->mdse', memb, np.eye(D, dtype=np.float32))
        memb_kron = np.ascontiguousarray(memb_kron.reshape(M, D, S * D))

        # KL block-column-sum + joint-subset selection matrix (S*D, Sj).
        ksum = np.zeros((S, D, Sj), np.float32)
        for j, p in enumerate(joint_pos):
            ksum[p, :, j] = 1.0
        ksum = np.ascontiguousarray(ksum.reshape(S * D, Sj))

        w_joint = reweight_weights(np.ones(Sj))
        ranges = _mixture_selection_ranges(w_joint, B)
        sel_ranges = tuple((int(r0), int(r1), int(joint_pos[k]))
                           for k, (r0, r1) in enumerate(ranges) if r1 > r0)

        prior_prec = (1.0 / (1.0 + 2.0 * EPS)) if flags.modality_poe else 0.0

        F = int(self.enc_w[present[0]].shape[0])
        w_enc = jnp.stack([self.enc_w[n] for n in present], axis=0)       # (M, F, 2D)
        memb_kron_j = jnp.asarray(memb_kron)
        ksum_j = jnp.asarray(ksum)
        w_row = jnp.asarray(w_joint.reshape(1, Sj), jnp.float32)
        w_vec = jnp.asarray(w_joint, jnp.float32)
        joint_pos_np = np.asarray(joint_pos, np.int32)

        pallas_fn = _build_fused_pallas_call(
            M=M, B=B, F=F, D=D, S=S, Sj=Sj, sel_ranges=sel_ranges,
            prior_prec=prior_prec, norm=float(flags.batch_size))

        def fused_forward(input_batch, eps):
            x = jnp.stack([jnp.asarray(input_batch[n], jnp.float32) for n in present],
                          axis=0)
            (emu, elv, smu, slv, jmu, jlv, z, klds, jd) = pallas_fn(
                x, w_enc, memb_kron_j, ksum_j, w_row, eps)
            enc_mods = {n: (emu[:, i * D:(i + 1) * D], elv[:, i * D:(i + 1) * D])
                        for i, n in enumerate(present)}
            smu3 = jnp.transpose(smu.reshape(B, S, D), (1, 0, 2))          # (S, B, D)
            slv3 = jnp.transpose(slv.reshape(B, S, D), (1, 0, 2))
            latents = {
                'modalities': enc_mods,
                'mus': smu3[joint_pos_np],
                'logvars': slv3[joint_pos_np],
                'weights': w_vec,
                'joint': [jmu, jlv],
                'subsets': {k: [smu3[i], slv3[i]] for i, k in enumerate(subset_keys)},
            }
            return {'latents': latents, 'z': z, 'klds': klds[0], 'jd': jd[0, 0]}

        cfg = SimpleNamespace(present=present, D=D, B=B, fn=jax.jit(fused_forward))
        self._configs[present] = cfg
        return cfg

    def _run(self, input_batch, eps):
        present = tuple(n for n in self.mod_names if n in input_batch)
        cfg = self._get_config(present)
        b_actual = int(input_batch[present[0]].shape[0])
        if b_actual != cfg.B:
            raise ValueError(
                f"actual batch {b_actual} != flags.batch_size {cfg.B}: KL normalization, "
                "eps draw and mixture-component selection are tied to flags.batch_size")
        if eps is None:
            # TODO(synk): inference() runs a no-op reparameterization with eps=0 (z == joint mu).
            eps = jnp.zeros((cfg.B, cfg.D), jnp.float32)
        return cfg.fn(input_batch, eps)

    # --- public API mirroring the PyTorch module ------------------------------------
    def inference(self, input_batch, num_samples=None):
        del num_samples  # batch size is tied to flags.batch_size (checked in _run)
        return self._run(input_batch, eps=None)['latents']

    def forward(self, input_batch, rng):
        eps = jax.random.normal(rng, (self.flags.batch_size, self.flags.class_dim),
                                jnp.float32)
        out = self._run(input_batch, eps)
        # TODO(synk): per-modality decoders / likelihoods are abstract in BaseMMVae.
        return {
            'latents': out['latents'],
            'group_distr': out['latents']['joint'],
            'class_embeddings': out['z'],
            'joint_divergence': out['jd'],
            'individual_divs': out['klds'],
            'dyn_prior': None,
        }


# ----------------------------------------------------------------------------
# numpy references for sanity checking
# ----------------------------------------------------------------------------
def ref_poe(mus, logvars):
    var = np.exp(logvars) + EPS
    T = 1.0 / (var + EPS)
    pd_mu = (mus * T).sum(0) / T.sum(0)
    pd_var = 1.0 / T.sum(0)
    return pd_mu, np.log(pd_var + EPS)


def ref_divergence(mus, logvars, weights, norm):
    term = 1.0 + logvars - np.exp(logvars) - mus * mus
    klds = -0.5 * term.sum(axis=(1, 2)) / norm
    return (weights * klds).sum(), klds


if __name__ == "__main__":
    key = jax.random.PRNGKey(0)
    B, F, D = 8, 16, 32          # batch, raw-feature dim, class_dim
    mod_names = ["m0", "m1", "m2"]

    flags = SimpleNamespace(batch_size=B, class_dim=D, joint_elbo=True,
                            modality_poe=False, modality_moe=False, modality_jsd=False,
                            alpha_modalities=[1.0 / (len(mod_names) + 1)] * (len(mod_names) + 1))
    modalities = {n: SimpleNamespace(name=n) for n in mod_names}
    subsets = {}
    for r in range(1, len(mod_names) + 1):
        for combo in itertools.combinations(mod_names, r):
            subsets["_".join(combo)] = [modalities[n] for n in combo]

    keys = jax.random.split(key, 3 * len(mod_names) + 1)
    enc_params, input_batch = {}, {}
    for i, n in enumerate(mod_names):
        Wm = 0.1 * jax.random.normal(keys[2 * i], (F, D), jnp.float32)
        Wl = 0.1 * jax.random.normal(keys[2 * i + 1], (F, D), jnp.float32)
        enc_params[n] = (Wm, Wl)
        input_batch[n] = jax.random.normal(keys[2 * len(mod_names) + i], (B, F),
                                           jnp.float32)
    rng_rep = keys[-1]

    model = BaseMMVaePallas(flags, modalities, subsets, enc_params)
    results = model.forward(input_batch, rng_rep)
    jax.block_until_ready(results['class_embeddings'])
    jax.block_until_ready(results['joint_divergence'])

    # --- sanity check against numpy reference --------------------------------------
    # Tolerances leave headroom for MXU matmul precision on the fused encoder dot.
    ATOL_ELT, ATOL_DIV = 1e-2, 5e-2
    x_np = {n: np.asarray(input_batch[n], np.float64) for n in mod_names}
    enc_np = {}
    for n in mod_names:
        Wm = np.asarray(enc_params[n][0], np.float64)
        Wl = np.asarray(enc_params[n][1], np.float64)
        enc_np[n] = (x_np[n] @ Wm, np.tanh(x_np[n] @ Wl))

    lat = results['latents']
    for n in mod_names:
        assert np.allclose(np.asarray(lat['modalities'][n][0]), enc_np[n][0], atol=ATOL_ELT)
        assert np.allclose(np.asarray(lat['modalities'][n][1]), enc_np[n][1], atol=ATOL_ELT)

    subset_keys = [k for k in subsets]
    smu_ref, slv_ref = {}, {}
    for k in subset_keys:
        names = [m.name for m in subsets[k]]
        mus_s = np.stack([enc_np[n][0] for n in names])
        lvs_s = np.stack([enc_np[n][1] for n in names])
        smu_ref[k], slv_ref[k] = ref_poe(mus_s, lvs_s)

    for i, k in enumerate(subset_keys):
        assert np.allclose(np.asarray(lat['subsets'][k][0]), smu_ref[k], atol=ATOL_ELT)
        assert np.allclose(np.asarray(lat['subsets'][k][1]), slv_ref[k], atol=ATOL_ELT)

    mus_stack = np.stack([smu_ref[k] for k in subset_keys])
    lvs_stack = np.stack([slv_ref[k] for k in subset_keys])
    S = len(subset_keys)
    w = np.ones(S) / S
    assert np.allclose(np.asarray(lat['mus']), mus_stack, atol=ATOL_ELT)
    assert np.allclose(np.asarray(lat['logvars']), lvs_stack, atol=ATOL_ELT)

    ranges = _mixture_selection_ranges(w, B)
    sel = np.zeros(B, np.int64)
    for k2, (r0, r1) in enumerate(ranges):
        sel[r0:r1] = k2
    jmu_ref = mus_stack[sel, np.arange(B), :]
    jlv_ref = lvs_stack[sel, np.arange(B), :]
    assert np.allclose(np.asarray(lat['joint'][0]), jmu_ref, atol=ATOL_ELT)
    assert np.allclose(np.asarray(lat['joint'][1]), jlv_ref, atol=ATOL_ELT)

    jd_ref, klds_ref = ref_divergence(mus_stack, lvs_stack, w, B)
    assert np.allclose(float(results['joint_divergence']), jd_ref, atol=ATOL_DIV)
    assert np.allclose(np.asarray(results['individual_divs']), klds_ref, atol=ATOL_DIV)

    eps_np = np.asarray(jax.random.normal(rng_rep, (B, D), jnp.float32), np.float64)
    z_ref = jmu_ref + eps_np * np.exp(0.5 * jlv_ref)
    assert np.allclose(np.asarray(results['class_embeddings']), z_ref, atol=2e-2)
    assert np.all(np.isfinite(np.asarray(results['class_embeddings'])))

    print("KERNEL_OK")
</pallas_src>

<mosaic_0001>
module attributes {stable_mosaic.version = 11 : i64} {
  func.func @_fused_mmvae_kernel(%arg0: i32, %arg1: memref<3x8x16xf32, #tpu.memory_space<vmem>>, %arg2: memref<3x16x64xf32, #tpu.memory_space<vmem>>, %arg3: memref<3x32x224xf32, #tpu.memory_space<vmem>>, %arg4: memref<224x7xf32, #tpu.memory_space<vmem>>, %arg5: memref<1x7xf32, #tpu.memory_space<vmem>>, %arg6: memref<8x32xf32, #tpu.memory_space<vmem>>, %arg7: memref<8x96xf32, #tpu.memory_space<vmem>>, %arg8: memref<8x96xf32, #tpu.memory_space<vmem>>, %arg9: memref<8x224xf32, #tpu.memory_space<vmem>>, %arg10: memref<8x224xf32, #tpu.memory_space<vmem>>, %arg11: memref<8x32xf32, #tpu.memory_space<vmem>>, %arg12: memref<8x32xf32, #tpu.memory_space<vmem>>, %arg13: memref<8x32xf32, #tpu.memory_space<vmem>>, %arg14: memref<1x7xf32, #tpu.memory_space<vmem>>, %arg15: memref<1x1xf32, #tpu.memory_space<vmem>>) attributes {dimension_semantics = [#tpu.dimension_semantics<arbitrary>], iteration_bounds = array<i64: 1>, scalar_prefetch = 0 : i64, scratch_operands = 0 : i64, tpu.core_type = #tpu.core_type<tc>, window_params = [{pipeline_mode = #tpu.pipeline_mode<synchronous>, transform_indices = @transform_0, window_bounds = array<i64: 3, 8, 16>}, {pipeline_mode = #tpu.pipeline_mode<synchronous>, transform_indices = @transform_1, window_bounds = array<i64: 3, 16, 64>}, {pipeline_mode = #tpu.pipeline_mode<synchronous>, transform_indices = @transform_2, window_bounds = array<i64: 3, 32, 224>}, {pipeline_mode = #tpu.pipeline_mode<synchronous>, transform_indices = @transform_3, window_bounds = array<i64: 224, 7>}, {pipeline_mode = #tpu.pipeline_mode<synchronous>, transform_indices = @transform_4, window_bounds = array<i64: 1, 7>}, {pipeline_mode = #tpu.pipeline_mode<synchronous>, transform_indices = @transform_5, window_bounds = array<i64: 8, 32>}, {pipeline_mode = #tpu.pipeline_mode<synchronous>, transform_indices = @transform_6, window_bounds = array<i64: 8, 96>}, {pipeline_mode = #tpu.pipeline_mode<synchronous>, transform_indices = @transform_7, window_bounds = array<i64: 8, 96>}, {pipeline_mode = #tpu.pipeline_mode<synchronous>, transform_indices = @transform_8, window_bounds = array<i64: 8, 224>}, {pipeline_mode = #tpu.pipeline_mode<synchronous>, transform_indices = @transform_9, window_bounds = array<i64: 8, 224>}, {pipeline_mode = #tpu.pipeline_mode<synchronous>, transform_indices = @transform_10, window_bounds = array<i64: 8, 32>}, {pipeline_mode = #tpu.pipeline_mode<synchronous>, transform_indices = @transform_11, window_bounds = array<i64: 8, 32>}, {pipeline_mode = #tpu.pipeline_mode<synchronous>, transform_indices = @transform_12, window_bounds = array<i64: 8, 32>}, {pipeline_mode = #tpu.pipeline_mode<synchronous>, transform_indices = @transform_13, window_bounds = array<i64: 1, 7>}, {pipeline_mode = #tpu.pipeline_mode<synchronous>, transform_indices = @transform_14, window_bounds = array<i64: 1, 1>}]} {
    %c0 = arith.constant 0 : index
    %c0_0 = arith.constant 0 : index
    %c0_1 = arith.constant 0 : index
    %0 = vector.load %arg1[%c0, %c0_0, %c0_1] : memref<3x8x16xf32, #tpu.memory_space<vmem>>, vector<1x8x16xf32>
    %1 = vector.shape_cast %0 : vector<1x8x16xf32> to vector<8x16xf32>
    %c0_2 = arith.constant 0 : index
    %c0_3 = arith.constant 0 : index
    %c0_4 = arith.constant 0 : index
    %2 = vector.load %arg2[%c0_2, %c0_3, %c0_4] : memref<3x16x64xf32, #tpu.memory_space<vmem>>, vector<1x16x64xf32>
    %3 = vector.shape_cast %2 : vector<1x16x64xf32> to vector<16x64xf32>
    %cst = arith.constant dense<0.000000e+00> : vector<8x64xf32>
    %4 = tpu.matmul %1, %3, %cst {dimension_numbers = #tpu.dot_dimension_numbers<[1], [0], [0], [1], [0, 0, 1, 1], [], []>} : vector<8x16xf32>, vector<16x64xf32>, vector<8x64xf32> -> vector<8x64xf32>
    %5 = vector.extract_strided_slice %4 {offsets = [0, 0], sizes = [8, 32], strides = [1, 1]} : vector<8x64xf32> to vector<8x32xf32>
    %6 = vector.extract_strided_slice %4 {offsets = [0, 32], sizes = [8, 32], strides = [1, 1]} : vector<8x64xf32> to vector<8x32xf32>
    %7 = math.tanh %6 : vector<8x32xf32>
    %c0_5 = arith.constant 0 : index
    %c0_6 = arith.constant 0 : index
    %8 = vector.load %arg7[%c0_5, %c0_6] : memref<8x96xf32, #tpu.memory_space<vmem>>, vector<8x32xf32>
    tpu.vector_store %arg7[%c0_5, %c0_6], %5 {strides = array<i32>} : memref<8x96xf32, #tpu.memory_space<vmem>>, vector<8x32xf32>,
    %c0_7 = arith.constant 0 : index
    %c0_8 = arith.constant 0 : index
    %9 = vector.load %arg8[%c0_7, %c0_8] : memref<8x96xf32, #tpu.memory_space<vmem>>, vector<8x32xf32>
    tpu.vector_store %arg8[%c0_7, %c0_8], %7 {strides = array<i32>} : memref<8x96xf32, #tpu.memory_space<vmem>>, vector<8x32xf32>,
    %10 = math.exp %7 : vector<8x32xf32>
    %cst_9 = arith.constant 2.000000e-08 : f32
    %11 = vector.broadcast %cst_9 : f32 to vector<8x32xf32>
    %12 = arith.addf %10, %11 : vector<8x32xf32>
    %13 = tpu.reciprocal %12 {approx = true} : vector<8x32xf32> -> vector<8x32xf32>
    %14 = arith.mulf %12, %13 : vector<8x32xf32>
    %cst_10 = arith.constant 2.000000e+00 : f32
    %15 = vector.broadcast %cst_10 : f32 to vector<8x32xf32>
    %16 = arith.subf %15, %14 : vector<8x32xf32>
    %17 = arith.mulf %13, %16 : vector<8x32xf32>
    %18 = arith.mulf %5, %17 : vector<8x32xf32>
    %c0_11 = arith.constant 0 : index
    %c0_12 = arith.constant 0 : index
    %c0_13 = arith.constant 0 : index
    %19 = vector.load %arg3[%c0_11, %c0_12, %c0_13] : memref<3x32x224xf32, #tpu.memory_space<vmem>>, vector<1x32x224xf32>
    %20 = vector.shape_cast %19 : vector<1x32x224xf32> to vector<32x224xf32>
    %cst_14 = arith.constant dense<0.000000e+00> : vector<8x224xf32>
    %21 = tpu.matmul %17, %20, %cst_14 {dimension_numbers = #tpu.dot_dimension_numbers<[1], [0], [0], [1], [0, 0, 1, 1], [], []>} : vector<8x32xf32>, vector<32x224xf32>, vector<8x224xf32> -> vector<8x224xf32>
    %cst_15 = arith.constant dense<0.000000e+00> : vector<8x224xf32>
    %22 = tpu.matmul %18, %20, %cst_15 {dimension_numbers = #tpu.dot_dimension_numbers<[1], [0], [0], [1], [0, 0, 1, 1], [], []>} : vector<8x32xf32>, vector<32x224xf32>, vector<8x224xf32> -> vector<8x224xf32>
    %c1 = arith.constant 1 : index
    %c0_16 = arith.constant 0 : index
    %c0_17 = arith.constant 0 : index
    %23 = vector.load %arg1[%c1, %c0_16, %c0_17] : memref<3x8x16xf32, #tpu.memory_space<vmem>>, vector<1x8x16xf32>
    %24 = vector.shape_cast %23 : vector<1x8x16xf32> to vector<8x16xf32>
    %c1_18 = arith.constant 1 : index
    %c0_19 = arith.constant 0 : index
    %c0_20 = arith.constant 0 : index
    %25 = vector.load %arg2[%c1_18, %c0_19, %c0_20] : memref<3x16x64xf32, #tpu.memory_space<vmem>>, vector<1x16x64xf32>
    %26 = vector.shape_cast %25 : vector<1x16x64xf32> to vector<16x64xf32>
    %cst_21 = arith.constant dense<0.000000e+00> : vector<8x64xf32>
    %27 = tpu.matmul %24, %26, %cst_21 {dimension_numbers = #tpu.dot_dimension_numbers<[1], [0], [0], [1], [0, 0, 1, 1], [], []>} : vector<8x16xf32>, vector<16x64xf32>, vector<8x64xf32> -> vector<8x64xf32>
    %28 = vector.extract_strided_slice %27 {offsets = [0, 0], sizes = [8, 32], strides = [1, 1]} : vector<8x64xf32> to vector<8x32xf32>
    %29 = vector.extract_strided_slice %27 {offsets = [0, 32], sizes = [8, 32], strides = [1, 1]} : vector<8x64xf32> to vector<8x32xf32>
    %30 = math.tanh %29 : vector<8x32xf32>
    %c0_22 = arith.constant 0 : index
    %c32 = arith.constant 32 : index
    %31 = vector.load %arg7[%c0_22, %c32] : memref<8x96xf32, #tpu.memory_space<vmem>>, vector<8x32xf32>
    tpu.vector_store %arg7[%c0_22, %c32], %28 {strides = array<i32>} : memref<8x96xf32, #tpu.memory_space<vmem>>, vector<8x32xf32>,
    %c0_23 = arith.constant 0 : index
    %c32_24 = arith.constant 32 : index
    %32 = vector.load %arg8[%c0_23, %c32_24] : memref<8x96xf32, #tpu.memory_space<vmem>>, vector<8x32xf32>
    tpu.vector_store %arg8[%c0_23, %c32_24], %30 {strides = array<i32>} : memref<8x96xf32, #tpu.memory_space<vmem>>, vector<8x32xf32>,
    %33 = math.exp %30 : vector<8x32xf32>
    %cst_25 = arith.constant 2.000000e-08 : f32
    %34 = vector.broadcast %cst_25 : f32 to vector<8x32xf32>
    %35 = arith.addf %33, %34 : vector<8x32xf32>
    %36 = tpu.reciprocal %35 {approx = true} : vector<8x32xf32> -> vector<8x32xf32>
    %37 = arith.mulf %35, %36 : vector<8x32xf32>
    %cst_26 = arith.constant 2.000000e+00 : f32
    %38 = vector.broadcast %cst_26 : f32 to vector<8x32xf32>
    %39 = arith.subf %38, %37 : vector<8x32xf32>
    %40 = arith.mulf %36, %39 : vector<8x32xf32>
    %41 = arith.mulf %28, %40 : vector<8x32xf32>
    %c1_27 = arith.constant 1 : index
    %c0_28 = arith.constant 0 : index
    %c0_29 = arith.constant 0 : index
    %42 = vector.load %arg3[%c1_27, %c0_28, %c0_29] : memref<3x32x224xf32, #tpu.memory_space<vmem>>, vector<1x32x224xf32>
    %43 = vector.shape_cast %42 : vector<1x32x224xf32> to vector<32x224xf32>
    %cst_30 = arith.constant dense<0.000000e+00> : vector<8x224xf32>
    %44 = tpu.matmul %40, %43, %cst_30 {dimension_numbers = #tpu.dot_dimension_numbers<[1], [0], [0], [1], [0, 0, 1, 1], [], []>} : vector<8x32xf32>, vector<32x224xf32>, vector<8x224xf32> -> vector<8x224xf32>
    %cst_31 = arith.constant dense<0.000000e+00> : vector<8x224xf32>
    %45 = tpu.matmul %41, %43, %cst_31 {dimension_numbers = #tpu.dot_dimension_numbers<[1], [0], [0], [1], [0, 0, 1, 1], [], []>} : vector<8x32xf32>, vector<32x224xf32>, vector<8x224xf32> -> vector<8x224xf32>
    %46 = arith.addf %21, %44 : vector<8x224xf32>
    %47 = arith.addf %22, %45 : vector<8x224xf32>
    %c2 = arith.constant 2 : index
    %c0_32 = arith.constant 0 : index
    %c0_33 = arith.constant 0 : index
    %48 = vector.load %arg1[%c2, %c0_32, %c0_33] : memref<3x8x16xf32, #tpu.memory_space<vmem>>, vector<1x8x16xf32>
    %49 = vector.shape_cast %48 : vector<1x8x16xf32> to vector<8x16xf32>
    %c2_34 = arith.constant 2 : index
    %c0_35 = arith.constant 0 : index
    %c0_36 = arith.constant 0 : index
    %50 = vector.load %arg2[%c2_34, %c0_35, %c0_36] : memref<3x16x64xf32, #tpu.memory_space<vmem>>, vector<1x16x64xf32>
    %51 = vector.shape_cast %50 : vector<1x16x64xf32> to vector<16x64xf32>
    %cst_37 = arith.constant dense<0.000000e+00> : vector<8x64xf32>
    %52 = tpu.matmul %49, %51, %cst_37 {dimension_numbers = #tpu.dot_dimension_numbers<[1], [0], [0], [1], [0, 0, 1, 1], [], []>} : vector<8x16xf32>, vector<16x64xf32>, vector<8x64xf32> -> vector<8x64xf32>
    %53 = vector.extract_strided_slice %52 {offsets = [0, 0], sizes = [8, 32], strides = [1, 1]} : vector<8x64xf32> to vector<8x32xf32>
    %54 = vector.extract_strided_slice %52 {offsets = [0, 32], sizes = [8, 32], strides = [1, 1]} : vector<8x64xf32> to vector<8x32xf32>
    %55 = math.tanh %54 : vector<8x32xf32>
    %c0_38 = arith.constant 0 : index
    %c64 = arith.constant 64 : index
    %56 = vector.load %arg7[%c0_38, %c64] : memref<8x96xf32, #tpu.memory_space<vmem>>, vector<8x32xf32>
    tpu.vector_store %arg7[%c0_38, %c64], %53 {strides = array<i32>} : memref<8x96xf32, #tpu.memory_space<vmem>>, vector<8x32xf32>,
    %c0_39 = arith.constant 0 : index
    %c64_40 = arith.constant 64 : index
    %57 = vector.load %arg8[%c0_39, %c64_40] : memref<8x96xf32, #tpu.memory_space<vmem>>, vector<8x32xf32>
    tpu.vector_store %arg8[%c0_39, %c64_40], %55 {strides = array<i32>} : memref<8x96xf32, #tpu.memory_space<vmem>>, vector<8x32xf32>,
    %58 = math.exp %55 : vector<8x32xf32>
    %cst_41 = arith.constant 2.000000e-08 : f32
    %59 = vector.broadcast %cst_41 : f32 to vector<8x32xf32>
    %60 = arith.addf %58, %59 : vector<8x32xf32>
    %61 = tpu.reciprocal %60 {approx = true} : vector<8x32xf32> -> vector<8x32xf32>
    %62 = arith.mulf %60, %61 : vector<8x32xf32>
    %cst_42 = arith.constant 2.000000e+00 : f32
    %63 = vector.broadcast %cst_42 : f32 to vector<8x32xf32>
    %64 = arith.subf %63, %62 : vector<8x32xf32>
    %65 = arith.mulf %61, %64 : vector<8x32xf32>
    %66 = arith.mulf %53, %65 : vector<8x32xf32>
    %c2_43 = arith.constant 2 : index
    %c0_44 = arith.constant 0 : index
    %c0_45 = arith.constant 0 : index
    %67 = vector.load %arg3[%c2_43, %c0_44, %c0_45] : memref<3x32x224xf32, #tpu.memory_space<vmem>>, vector<1x32x224xf32>
    %68 = vector.shape_cast %67 : vector<1x32x224xf32> to vector<32x224xf32>
    %cst_46 = arith.constant dense<0.000000e+00> : vector<8x224xf32>
    %69 = tpu.matmul %65, %68, %cst_46 {dimension_numbers = #tpu.dot_dimension_numbers<[1], [0], [0], [1], [0, 0, 1, 1], [], []>} : vector<8x32xf32>, vector<32x224xf32>, vector<8x224xf32> -> vector<8x224xf32>
    %cst_47 = arith.constant dense<0.000000e+00> : vector<8x224xf32>
    %70 = tpu.matmul %66, %68, %cst_47 {dimension_numbers = #tpu.dot_dimension_numbers<[1], [0], [0], [1], [0, 0, 1, 1], [], []>} : vector<8x32xf32>, vector<32x224xf32>, vector<8x224xf32> -> vector<8x224xf32>
    %71 = arith.addf %46, %69 : vector<8x224xf32>
    %72 = arith.addf %47, %70 : vector<8x224xf32>
    %73 = tpu.reciprocal %71 {approx = true} : vector<8x224xf32> -> vector<8x224xf32>
    %74 = arith.mulf %71, %73 : vector<8x224xf32>
    %cst_48 = arith.constant 2.000000e+00 : f32
    %75 = vector.broadcast %cst_48 : f32 to vector<8x224xf32>
    %76 = arith.subf %75, %74 : vector<8x224xf32>
    %77 = arith.mulf %73, %76 : vector<8x224xf32>
    %78 = arith.mulf %72, %77 : vector<8x224xf32>
    %cst_49 = arith.constant 9.99999993E-9 : f32
    %79 = vector.broadcast %cst_49 : f32 to vector<8x224xf32>
    %80 = arith.addf %77, %79 : vector<8x224xf32>
    %81 = math.log %80 : vector<8x224xf32>
    %c0_50 = arith.constant 0 : index
    %c0_51 = arith.constant 0 : index
    %82 = vector.load %arg9[%c0_50, %c0_51] : memref<8x224xf32, #tpu.memory_space<vmem>>, vector<8x224xf32>
    tpu.vector_store %arg9[%c0_50, %c0_51], %78 {strides = array<i32>} : memref<8x224xf32, #tpu.memory_space<vmem>>, vector<8x224xf32>,
    %c0_52 = arith.constant 0 : index
    %c0_53 = arith.constant 0 : index
    %83 = vector.load %arg10[%c0_52, %c0_53] : memref<8x224xf32, #tpu.memory_space<vmem>>, vector<8x224xf32>
    tpu.vector_store %arg10[%c0_52, %c0_53], %81 {strides = array<i32>} : memref<8x224xf32, #tpu.memory_space<vmem>>, vector<8x224xf32>,
    %84 = vector.extract_strided_slice %78 {offsets = [0, 0], sizes = [1, 32], strides = [1, 1]} : vector<8x224xf32> to vector<1x32xf32>
    %85 = vector.extract_strided_slice %81 {offsets = [0, 0], sizes = [1, 32], strides = [1, 1]} : vector<8x224xf32> to vector<1x32xf32>
    %c0_54 = arith.constant 0 : index
    %c0_55 = arith.constant 0 : index
    %86 = vector.load %arg11[%c0_54, %c0_55] : memref<8x32xf32, #tpu.memory_space<vmem>>, vector<1x32xf32>
    tpu.vector_store %arg11[%c0_54, %c0_55], %84 {strides = array<i32>} : memref<8x32xf32, #tpu.memory_space<vmem>>, vector<1x32xf32>,
    %c0_56 = arith.constant 0 : index
    %c0_57 = arith.constant 0 : index
    %87 = vector.load %arg12[%c0_56, %c0_57] : memref<8x32xf32, #tpu.memory_space<vmem>>, vector<1x32xf32>
    tpu.vector_store %arg12[%c0_56, %c0_57], %85 {strides = array<i32>} : memref<8x32xf32, #tpu.memory_space<vmem>>, vector<1x32xf32>,
    %c0_58 = arith.constant 0 : index
    %c0_59 = arith.constant 0 : index
    %88 = vector.load %arg6[%c0_58, %c0_59] : memref<8x32xf32, #tpu.memory_space<vmem>>, vector<1x32xf32>
    %cst_60 = arith.constant 5.000000e-01 : f32
    %89 = vector.broadcast %cst_60 : f32 to vector<1x32xf32>
    %90 = arith.mulf %89, %85 : vector<1x32xf32>
    %91 = math.exp %90 : vector<1x32xf32>
    %92 = arith.mulf %88, %91 : vector<1x32xf32>
    %93 = arith.addf %84, %92 : vector<1x32xf32>
    %c0_61 = arith.constant 0 : index
    %c0_62 = arith.constant 0 : index
    %94 = vector.load %arg13[%c0_61, %c0_62] : memref<8x32xf32, #tpu.memory_space<vmem>>, vector<1x32xf32>
    tpu.vector_store %arg13[%c0_61, %c0_62], %93 {strides = array<i32>} : memref<8x32xf32, #tpu.memory_space<vmem>>, vector<1x32xf32>,
    %95 = vector.extract_strided_slice %78 {offsets = [1, 32], sizes = [1, 32], strides = [1, 1]} : vector<8x224xf32> to vector<1x32xf32>
    %96 = vector.extract_strided_slice %81 {offsets = [1, 32], sizes = [1, 32], strides = [1, 1]} : vector<8x224xf32> to vector<1x32xf32>
    %c1_63 = arith.constant 1 : index
    %c0_64 = arith.constant 0 : index
    %97 = vector.load %arg11[%c1_63, %c0_64] : memref<8x32xf32, #tpu.memory_space<vmem>>, vector<1x32xf32>
    tpu.vector_store %arg11[%c1_63, %c0_64], %95 {strides = array<i32>} : memref<8x32xf32, #tpu.memory_space<vmem>>, vector<1x32xf32>,
    %c1_65 = arith.constant 1 : index
    %c0_66 = arith.constant 0 : index
    %98 = vector.load %arg12[%c1_65, %c0_66] : memref<8x32xf32, #tpu.memory_space<vmem>>, vector<1x32xf32>
    tpu.vector_store %arg12[%c1_65, %c0_66], %96 {strides = array<i32>} : memref<8x32xf32, #tpu.memory_space<vmem>>, vector<1x32xf32>,
    %c1_67 = arith.constant 1 : index
    %c0_68 = arith.constant 0 : index
    %99 = vector.load %arg6[%c1_67, %c0_68] : memref<8x32xf32, #tpu.memory_space<vmem>>, vector<1x32xf32>
    %cst_69 = arith.constant 5.000000e-01 : f32
    %100 = vector.broadcast %cst_69 : f32 to vector<1x32xf32>
    %101 = arith.mulf %100, %96 : vector<1x32xf32>
    %102 = math.exp %101 : vector<1x32xf32>
    %103 = arith.mulf %99, %102 : vector<1x32xf32>
    %104 = arith.addf %95, %103 : vector<1x32xf32>
    %c1_70 = arith.constant 1 : index
    %c0_71 = arith.constant 0 : index
    %105 = vector.load %arg13[%c1_70, %c0_71] : memref<8x32xf32, #tpu.memory_space<vmem>>, vector<1x32xf32>
    tpu.vector_store %arg13[%c1_70, %c0_71], %104 {strides = array<i32>} : memref<8x32xf32, #tpu.memory_space<vmem>>, vector<1x32xf32>,
    %106 = vector.extract_strided_slice %78 {offsets = [2, 64], sizes = [1, 32], strides = [1, 1]} : vector<8x224xf32> to vector<1x32xf32>
    %107 = vector.extract_strided_slice %81 {offsets = [2, 64], sizes = [1, 32], strides = [1, 1]} : vector<8x224xf32> to vector<1x32xf32>
    %c2_72 = arith.constant 2 : index
    %c0_73 = arith.constant 0 : index
    %108 = vector.load %arg11[%c2_72, %c0_73] : memref<8x32xf32, #tpu.memory_space<vmem>>, vector<1x32xf32>
    tpu.vector_store %arg11[%c2_72, %c0_73], %106 {strides = array<i32>} : memref<8x32xf32, #tpu.memory_space<vmem>>, vector<1x32xf32>,
    %c2_74 = arith.constant 2 : index
    %c0_75 = arith.constant 0 : index
    %109 = vector.load %arg12[%c2_74, %c0_75] : memref<8x32xf32, #tpu.memory_space<vmem>>, vector<1x32xf32>
    tpu.vector_store %arg12[%c2_74, %c0_75], %107 {strides = array<i32>} : memref<8x32xf32, #tpu.memory_space<vmem>>, vector<1x32xf32>,
    %c2_76 = arith.constant 2 : index
    %c0_77 = arith.constant 0 : index
    %110 = vector.load %arg6[%c2_76, %c0_77] : memref<8x32xf32, #tpu.memory_space<vmem>>, vector<1x32xf32>
    %cst_78 = arith.constant 5.000000e-01 : f32
    %111 = vector.broadcast %cst_78 : f32 to vector<1x32xf32>
    %112 = arith.mulf %111, %107 : vector<1x32xf32>
    %113 = math.exp %112 : vector<1x32xf32>
    %114 = arith.mulf %110, %113 : vector<1x32xf32>
    %115 = arith.addf %106, %114 : vector<1x32xf32>
    %c2_79 = arith.constant 2 : index
    %c0_80 = arith.constant 0 : index
    %116 = vector.load %arg13[%c2_79, %c0_80] : memref<8x32xf32, #tpu.memory_space<vmem>>, vector<1x32xf32>
    tpu.vector_store %arg13[%c2_79, %c0_80], %115 {strides = array<i32>} : memref<8x32xf32, #tpu.memory_space<vmem>>, vector<1x32xf32>,
    %117 = vector.extract_strided_slice %78 {offsets = [3, 96], sizes = [1, 32], strides = [1, 1]} : vector<8x224xf32> to vector<1x32xf32>
    %118 = vector.extract_strided_slice %81 {offsets = [3, 96], sizes = [1, 32], strides = [1, 1]} : vector<8x224xf32> to vector<1x32xf32>
    %c3 = arith.constant 3 : index
    %c0_81 = arith.constant 0 : index
    %119 = vector.load %arg11[%c3, %c0_81] : memref<8x32xf32, #tpu.memory_space<vmem>>, vector<1x32xf32>
    tpu.vector_store %arg11[%c3, %c0_81], %117 {strides = array<i32>} : memref<8x32xf32, #tpu.memory_space<vmem>>, vector<1x32xf32>,
    %c3_82 = arith.constant 3 : index
    %c0_83 = arith.constant 0 : index
    %120 = vector.load %arg12[%c3_82, %c0_83] : memref<8x32xf32, #tpu.memory_space<vmem>>, vector<1x32xf32>
    tpu.vector_store %arg12[%c3_82, %c0_83], %118 {strides = array<i32>} : memref<8x32xf32, #tpu.memory_space<vmem>>, vector<1x32xf32>,
    %c3_84 = arith.constant 3 : index
    %c0_85 = arith.constant 0 : index
    %121 = vector.load %arg6[%c3_84, %c0_85] : memref<8x32xf32, #tpu.memory_space<vmem>>, vector<1x32xf32>
    %cst_86 = arith.constant 5.000000e-01 : f32
    %122 = vector.broadcast %cst_86 : f32 to vector<1x32xf32>
    %123 = arith.mulf %122, %118 : vector<1x32xf32>
    %124 = math.exp %123 : vector<1x32xf32>
    %125 = arith.mulf %121, %124 : vector<1x32xf32>
    %126 = arith.addf %117, %125 : vector<1x32xf32>
    %c3_87 = arith.constant 3 : index
    %c0_88 = arith.constant 0 : index
    %127 = vector.load %arg13[%c3_87, %c0_88] : memref<8x32xf32, #tpu.memory_space<vmem>>, vector<1x32xf32>
    tpu.vector_store %arg13[%c3_87, %c0_88], %126 {strides = array<i32>} : memref<8x32xf32, #tpu.memory_space<vmem>>, vector<1x32xf32>,
    %128 = vector.extract_strided_slice %78 {offsets = [4, 128], sizes = [1, 32], strides = [1, 1]} : vector<8x224xf32> to vector<1x32xf32>
    %129 = vector.extract_strided_slice %81 {offsets = [4, 128], sizes = [1, 32], strides = [1, 1]} : vector<8x224xf32> to vector<1x32xf32>
    %c4 = arith.constant 4 : index
    %c0_89 = arith.constant 0 : index
    %130 = vector.load %arg11[%c4, %c0_89] : memref<8x32xf32, #tpu.memory_space<vmem>>, vector<1x32xf32>
    tpu.vector_store %arg11[%c4, %c0_89], %128 {strides = array<i32>} : memref<8x32xf32, #tpu.memory_space<vmem>>, vector<1x32xf32>,
    %c4_90 = arith.constant 4 : index
    %c0_91 = arith.constant 0 : index
    %131 = vector.load %arg12[%c4_90, %c0_91] : memref<8x32xf32, #tpu.memory_space<vmem>>, vector<1x32xf32>
    tpu.vector_store %arg12[%c4_90, %c0_91], %129 {strides = array<i32>} : memref<8x32xf32, #tpu.memory_space<vmem>>, vector<1x32xf32>,
    %c4_92 = arith.constant 4 : index
    %c0_93 = arith.constant 0 : index
    %132 = vector.load %arg6[%c4_92, %c0_93] : memref<8x32xf32, #tpu.memory_space<vmem>>, vector<1x32xf32>
    %cst_94 = arith.constant 5.000000e-01 : f32
    %133 = vector.broadcast %cst_94 : f32 to vector<1x32xf32>
    %134 = arith.mulf %133, %129 : vector<1x32xf32>
    %135 = math.exp %134 : vector<1x32xf32>
    %136 = arith.mulf %132, %135 : vector<1x32xf32>
    %137 = arith.addf %128, %136 : vector<1x32xf32>
    %c4_95 = arith.constant 4 : index
    %c0_96 = arith.constant 0 : index
    %138 = vector.load %arg13[%c4_95, %c0_96] : memref<8x32xf32, #tpu.memory_space<vmem>>, vector<1x32xf32>
    tpu.vector_store %arg13[%c4_95, %c0_96], %137 {strides = array<i32>} : memref<8x32xf32, #tpu.memory_space<vmem>>, vector<1x32xf32>,
    %139 = vector.extract_strided_slice %78 {offsets = [5, 160], sizes = [1, 32], strides = [1, 1]} : vector<8x224xf32> to vector<1x32xf32>
    %140 = vector.extract_strided_slice %81 {offsets = [5, 160], sizes = [1, 32], strides = [1, 1]} : vector<8x224xf32> to vector<1x32xf32>
    %c5 = arith.constant 5 : index
    %c0_97 = arith.constant 0 : index
    %141 = vector.load %arg11[%c5, %c0_97] : memref<8x32xf32, #tpu.memory_space<vmem>>, vector<1x32xf32>
    tpu.vector_store %arg11[%c5, %c0_97], %139 {strides = array<i32>} : memref<8x32xf32, #tpu.memory_space<vmem>>, vector<1x32xf32>,
    %c5_98 = arith.constant 5 : index
    %c0_99 = arith.constant 0 : index
    %142 = vector.load %arg12[%c5_98, %c0_99] : memref<8x32xf32, #tpu.memory_space<vmem>>, vector<1x32xf32>
    tpu.vector_store %arg12[%c5_98, %c0_99], %140 {strides = array<i32>} : memref<8x32xf32, #tpu.memory_space<vmem>>, vector<1x32xf32>,
    %c5_100 = arith.constant 5 : index
    %c0_101 = arith.constant 0 : index
    %143 = vector.load %arg6[%c5_100, %c0_101] : memref<8x32xf32, #tpu.memory_space<vmem>>, vector<1x32xf32>
    %cst_102 = arith.constant 5.000000e-01 : f32
    %144 = vector.broadcast %cst_102 : f32 to vector<1x32xf32>
    %145 = arith.mulf %144, %140 : vector<1x32xf32>
    %146 = math.exp %145 : vector<1x32xf32>
    %147 = arith.mulf %143, %146 : vector<1x32xf32>
    %148 = arith.addf %139, %147 : vector<1x32xf32>
    %c5_103 = arith.constant 5 : index
    %c0_104 = arith.constant 0 : index
    %149 = vector.load %arg13[%c5_103, %c0_104] : memref<8x32xf32, #tpu.memory_space<vmem>>, vector<1x32xf32>
    tpu.vector_store %arg13[%c5_103, %c0_104], %148 {strides = array<i32>} : memref<8x32xf32, #tpu.memory_space<vmem>>, vector<1x32xf32>,
    %150 = vector.extract_strided_slice %78 {offsets = [6, 192], sizes = [2, 32], strides = [1, 1]} : vector<8x224xf32> to vector<2x32xf32>
    %151 = vector.extract_strided_slice %81 {offsets = [6, 192], sizes = [2, 32], strides = [1, 1]} : vector<8x224xf32> to vector<2x32xf32>
    %c6 = arith.constant 6 : index
    %c0_105 = arith.constant 0 : index
    %152 = vector.load %arg11[%c6, %c0_105] : memref<8x32xf32, #tpu.memory_space<vmem>>, vector<2x32xf32>
    tpu.vector_store %arg11[%c6, %c0_105], %150 {strides = array<i32>} : memref<8x32xf32, #tpu.memory_space<vmem>>, vector<2x32xf32>,
    %c6_106 = arith.constant 6 : index
    %c0_107 = arith.constant 0 : index
    %153 = vector.load %arg12[%c6_106, %c0_107] : memref<8x32xf32, #tpu.memory_space<vmem>>, vector<2x32xf32>
    tpu.vector_store %arg12[%c6_106, %c0_107], %151 {strides = array<i32>} : memref<8x32xf32, #tpu.memory_space<vmem>>, vector<2x32xf32>,
    %c6_108 = arith.constant 6 : index
    %c0_109 = arith.constant 0 : index
    %154 = vector.load %arg6[%c6_108, %c0_109] : memref<8x32xf32, #tpu.memory_space<vmem>>, vector<2x32xf32>
    %cst_110 = arith.constant 5.000000e-01 : f32
    %155 = vector.broadcast %cst_110 : f32 to vector<2x32xf32>
    %156 = arith.mulf %155, %151 : vector<2x32xf32>
    %157 = math.exp %156 : vector<2x32xf32>
    %158 = arith.mulf %154, %157 : vector<2x32xf32>
    %159 = arith.addf %150, %158 : vector<2x32xf32>
    %c6_111 = arith.constant 6 : index
    %c0_112 = arith.constant 0 : index
    %160 = vector.load %arg13[%c6_111, %c0_112] : memref<8x32xf32, #tpu.memory_space<vmem>>, vector<2x32xf32>
    tpu.vector_store %arg13[%c6_111, %c0_112], %159 {strides = array<i32>} : memref<8x32xf32, #tpu.memory_space<vmem>>, vector<2x32xf32>,
    %cst_113 = arith.constant 1.000000e+00 : f32
    %161 = vector.broadcast %cst_113 : f32 to vector<8x224xf32>
    %162 = arith.addf %161, %81 : vector<8x224xf32>
    %cst_114 = arith.constant 9.99999993E-9 : f32
    %163 = vector.broadcast %cst_114 : f32 to vector<8x224xf32>
    %164 = arith.addf %77, %163 : vector<8x224xf32>
    %165 = arith.subf %162, %164 : vector<8x224xf32>
    %166 = arith.mulf %78, %78 : vector<8x224xf32>
    %167 = arith.subf %165, %166 : vector<8x224xf32>
    %c0_115 = arith.constant 0 : index
    %c0_116 = arith.constant 0 : index
    %168 = vector.load %arg4[%c0_115, %c0_116] : memref<224x7xf32, #tpu.memory_space<vmem>>, vector<224x7xf32>
    %cst_117 = arith.constant dense<0.000000e+00> : vector<8x7xf32>
    %169 = tpu.matmul %167, %168, %cst_117 {dimension_numbers = #tpu.dot_dimension_numbers<[1], [0], [0], [1], [0, 0, 1, 1], [], []>} : vector<8x224xf32>, vector<224x7xf32>, vector<8x7xf32> -> vector<8x7xf32>
    %cst_118 = arith.constant dense<0.000000e+00> : vector<7xf32>
    %170 = vector.multi_reduction <add>, %169, %cst_118 [0] : vector<8x7xf32> to vector<7xf32>
    %171 = vector.shape_cast %170 : vector<7xf32> to vector<1x7xf32>
    %cst_119 = arith.constant -6.250000e-02 : f32
    %172 = vector.broadcast %cst_119 : f32 to vector<1x7xf32>
    %173 = arith.mulf %172, %171 : vector<1x7xf32>
    %c0_120 = arith.constant 0 : index
    %c0_121 = arith.constant 0 : index
    %174 = vector.load %arg14[%c0_120, %c0_121] : memref<1x7xf32, #tpu.memory_space<vmem>>, vector<1x7xf32>
    tpu.vector_store %arg14[%c0_120, %c0_121], %173 {strides = array<i32>} : memref<1x7xf32, #tpu.memory_space<vmem>>, vector<1x7xf32>,
    %c0_122 = arith.constant 0 : index
    %c0_123 = arith.constant 0 : index
    %175 = vector.load %arg5[%c0_122, %c0_123] : memref<1x7xf32, #tpu.memory_space<vmem>>, vector<1x7xf32>
    %176 = arith.mulf %175, %173 : vector<1x7xf32>
    %cst_124 = arith.constant dense<0.000000e+00> : vector<1xf32>
    %177 = vector.multi_reduction <add>, %176, %cst_124 [1] : vector<1x7xf32> to vector<1xf32>
    %178 = vector.shape_cast %177 : vector<1xf32> to vector<1x1xf32>
    %c0_125 = arith.constant 0 : index
    %c0_126 = arith.constant 0 : index
    %179 = vector.load %arg15[%c0_125, %c0_126] : memref<1x1xf32, #tpu.memory_space<vmem>>, vector<1x1xf32>
    tpu.vector_store %arg15[%c0_125, %c0_126], %178 {strides = array<i32>} : memref<1x1xf32, #tpu.memory_space<vmem>>, vector<1x1xf32>,
    return
  }
  func.func @transform_0(%arg0: i32) -> (i32, i32, i32) {
    %c0_i32 = arith.constant 0 : i32
    %c0_i32_0 = arith.constant 0 : i32
    %c0_i32_1 = arith.constant 0 : i32
    %c0_i32_2 = arith.constant 0 : i32
    return %c0_i32, %c0_i32_0, %c0_i32_1 : i32, i32, i32
  }
  func.func @transform_1(%arg0: i32) -> (i32, i32, i32) {
    %c0_i32 = arith.constant 0 : i32
    %c0_i32_0 = arith.constant 0 : i32
    %c0_i32_1 = arith.constant 0 : i32
    %c0_i32_2 = arith.constant 0 : i32
    return %c0_i32, %c0_i32_0, %c0_i32_1 : i32, i32, i32
  }
  func.func @transform_2(%arg0: i32) -> (i32, i32, i32) {
    %c0_i32 = arith.constant 0 : i32
    %c0_i32_0 = arith.constant 0 : i32
    %c0_i32_1 = arith.constant 0 : i32
    %c0_i32_2 = arith.constant 0 : i32
    return %c0_i32, %c0_i32_0, %c0_i32_1 : i32, i32, i32
  }
  func.func @transform_3(%arg0: i32) -> (i32, i32) {
    %c0_i32 = arith.constant 0 : i32
    %c0_i32_0 = arith.constant 0 : i32
    %c0_i32_1 = arith.constant 0 : i32
    return %c0_i32, %c0_i32_0 : i32, i32
  }
  func.func @transform_4(%arg0: i32) -> (i32, i32) {
    %c0_i32 = arith.constant 0 : i32
    %c0_i32_0 = arith.constant 0 : i32
    %c0_i32_1 = arith.constant 0 : i32
    return %c0_i32, %c0_i32_0 : i32, i32
  }
  func.func @transform_5(%arg0: i32) -> (i32, i32) {
    %c0_i32 = arith.constant 0 : i32
    %c0_i32_0 = arith.constant 0 : i32
    %c0_i32_1 = arith.constant 0 : i32
    return %c0_i32, %c0_i32_0 : i32, i32
  }
  func.func @transform_6(%arg0: i32) -> (i32, i32) {
    %c0_i32 = arith.constant 0 : i32
    %c0_i32_0 = arith.constant 0 : i32
    %c0_i32_1 = arith.constant 0 : i32
    return %c0_i32, %c0_i32_0 : i32, i32
  }
  func.func @transform_7(%arg0: i32) -> (i32, i32) {
    %c0_i32 = arith.constant 0 : i32
    %c0_i32_0 = arith.constant 0 : i32
    %c0_i32_1 = arith.constant 0 : i32
    return %c0_i32, %c0_i32_0 : i32, i32
  }
  func.func @transform_8(%arg0: i32) -> (i32, i32) {
    %c0_i32 = arith.constant 0 : i32
    %c0_i32_0 = arith.constant 0 : i32
    %c0_i32_1 = arith.constant 0 : i32
    return %c0_i32, %c0_i32_0 : i32, i32
  }
  func.func @transform_9(%arg0: i32) -> (i32, i32) {
    %c0_i32 = arith.constant 0 : i32
    %c0_i32_0 = arith.constant 0 : i32
    %c0_i32_1 = arith.constant 0 : i32
    return %c0_i32, %c0_i32_0 : i32, i32
  }
  func.func @transform_10(%arg0: i32) -> (i32, i32) {
    %c0_i32 = arith.constant 0 : i32
    %c0_i32_0 = arith.constant 0 : i32
    %c0_i32_1 = arith.constant 0 : i32
    return %c0_i32, %c0_i32_0 : i32, i32
  }
  func.func @transform_11(%arg0: i32) -> (i32, i32) {
    %c0_i32 = arith.constant 0 : i32
    %c0_i32_0 = arith.constant 0 : i32
    %c0_i32_1 = arith.constant 0 : i32
    return %c0_i32, %c0_i32_0 : i32, i32
  }
  func.func @transform_12(%arg0: i32) -> (i32, i32) {
    %c0_i32 = arith.constant 0 : i32
    %c0_i32_0 = arith.constant 0 : i32
    %c0_i32_1 = arith.constant 0 : i32
    return %c0_i32, %c0_i32_0 : i32, i32
  }
  func.func @transform_13(%arg0: i32) -> (i32, i32) {
    %c0_i32 = arith.constant 0 : i32
    %c0_i32_0 = arith.constant 0 : i32
    %c0_i32_1 = arith.constant 0 : i32
    return %c0_i32, %c0_i32_0 : i32, i32
  }
  func.func @transform_14(%arg0: i32) -> (i32, i32) {
    %c0_i32 = arith.constant 0 : i32
    %c0_i32_0 = arith.constant 0 : i32
    %c0_i32_1 = arith.constant 0 : i32
    return %c0_i32, %c0_i32_0 : i32, i32
  }
}

</mosaic_0001>

<llo_original>
// kernel: fused_forward.1
$region0: #{fused_forward.1}
  #allocation0 [shape = 'u32[]', space=smem, size = 0x4, offset = 0x4, fixed_abs, tag = 'smem constant byte address 0x4 - core index']
  #allocation1 [shape = 'u32[144,128]{1,0:T(1,128)}', space=vmem, size = 0x12000, scoped, tag = 'internal scratch']
  %s0 = inlined_call_operand.vmem [shape: f32[3,8,16], index: 0, kind: input, shape index: {}]
  %s1 = inlined_call_operand.vmem [shape: f32[3,16,64], index: 1, kind: input, shape index: {}]
  %s2 = inlined_call_operand.hbm [shape: f32[3,32,224], index: 2, kind: input, shape index: {}]
  %s3 = inlined_call_operand.hbm [shape: f32[224,7], index: 3, kind: input, shape index: {}]
  %s4 = inlined_call_operand.vmem [shape: f32[1,7], index: 4, kind: input, shape index: {}]
  %s5 = inlined_call_operand.vmem [shape: f32[8,32], index: 5, kind: input, shape index: {}]
  %s6 = inlined_call_operand.vmem [shape: f32[8,96], index: 6, kind: output, shape index: {0}]
  %s7 = inlined_call_operand.vmem [shape: f32[8,96], index: 7, kind: output, shape index: {1}]
  %s8 = inlined_call_operand.vmem [shape: f32[8,224], index: 8, kind: output, shape index: {2}]
  %s9 = inlined_call_operand.vmem [shape: f32[8,224], index: 9, kind: output, shape index: {3}]
  %s10 = inlined_call_operand.hbm [shape: f32[8,32], index: 10, kind: output, shape index: {4}]
  %s11 = inlined_call_operand.hbm [shape: f32[8,32], index: 11, kind: output, shape index: {5}]
  %s12 = inlined_call_operand.hbm [shape: f32[8,32], index: 12, kind: output, shape index: {6}]
  %s13 = inlined_call_operand.hbm [shape: f32[1,7], index: 13, kind: output, shape index: {7}]
  %s14 = inlined_call_operand.hbm [shape: f32[1,1], index: 14, kind: output, shape index: {8}]
  %15 = xla_tuple %s6, %s7, %s8, %s9, %s10, %s11, %s12, %s13, %s14
  %s16 = sld [smem:[#allocation0]]
  $region106: #{fused_forward.1} parent=0
    _
  %s18 = ssub.s32 1, %s16
  %s19 = scalar_select 0, %s18, %s16
  $region1: #{fused_forward.1} parent=0
    #allocation2 [shape = 'u8[98304]{0}', space=vmem, size = 0x18000, scoped, tag = 'input window, operand 2, single buffered']
    #allocation3 [shape = 's32[1]{0}', space=sflag, size = 0x4, scoped, tag = 'scoped memory for fused_forward.1']
    #allocation4 [shape = 's32[1]{0}', space=sflag, size = 0x4, scoped, tag = 'scoped memory for fused_forward.1']
    #allocation5 [shape = 'u8[114688]{0}', space=vmem, size = 0x1c000, scoped, tag = 'input window, operand 3, single buffered']
    #allocation6 [shape = 's32[1]{0}', space=sflag, size = 0x4, scoped, tag = 'scoped memory for fused_forward.1']
    #allocation7 [shape = 'u8[4096]{0}', space=vmem, size = 0x1000, scoped, tag = 'output window, operand 4, single buffered']
    #allocation8 [shape = 'u8[4096]{0}', space=vmem, size = 0x1000, scoped, tag = 'output window, operand 5, single buffered']
    #allocation9 [shape = 's32[1]{0}', space=sflag, size = 0x4, scoped, tag = 'scoped memory for fused_forward.1']
    #allocation10 [shape = 'u8[4096]{0}', space=vmem, size = 0x1000, scoped, tag = 'output window, operand 6, single buffered']
    #allocation11 [shape = 'u8[512]{0}', space=vmem, size = 0x400, scoped, tag = 'output window, operand 7, single buffered']
    #allocation12 [shape = 's32[1]{0}', space=sflag, size = 0x4, scoped, tag = 'scoped memory for fused_forward.1']
    #allocation13 [shape = 'u8[512]{0}', space=vmem, size = 0x400, scoped, tag = 'output window, operand 8, single buffered']
    %20 = vsyncpa [#allocation3], 0
    %21 = vsyncpa [#allocation6], 0
    %22 = vsyncpa [#allocation4], 0
    %23 = vsyncpa [#allocation9], 0
    %24 = vsyncpa [#allocation12], 0
    // Predicated region
    $region2: #{fused_forward.1} parent=1 // pred_check
      _
    $region3: #{fused_forward.1} parent=1 // pred_check_branch
      %26 = sbr.rel (0) target = $region5
    $region4: #{fused_forward.1} parent=1 // pred_region
      _
    $region5: #{fused_forward.1} parent=1 // pred_fallthru
      _
    // Predicated region
    $region6: #{fused_forward.1} parent=1 // pred_check
      _
    $region7: #{fused_forward.1} parent=1 // pred_check_branch
      %28 = sbr.rel (0) target = $region9
    $region8: #{fused_forward.1} parent=1 // pred_region
      _
    $region9: #{fused_forward.1} parent=1 // pred_fallthru
      _
    // Predicated region
    $region10: #{fused_forward.1} parent=1 // pred_check
      _
    $region11: #{fused_forward.1} parent=1 // pred_check_branch
      %30 = sbr.rel (0) target = $region13
    $region12: #{fused_forward.1} parent=1 // pred_region
      %s32 = ssub.s32 3072, 3072
      %33 = vsyncadd [#allocation3], %s32
      %s34 = sshll.u32 [#allocation2], 4
      %s35 = int_to_ptr.vmem [resolvable:$true] %s34
      %40 = dma.hbm_to_vmem [thread:$0]  %s2, 3072, %s35, [#allocation3], 256, 256, 16
    $region13: #{fused_forward.1} parent=1 // pred_fallthru
      _
    // Predicated region
    $region14: #{fused_forward.1} parent=1 // pred_check
      _
    $region15: #{fused_forward.1} parent=1 // pred_check_branch
      %42 = sbr.rel (0) target = $region17
    $region16: #{fused_forward.1} parent=1 // pred_region
      %s44 = ssub.s32 3584, 3584
      %45 = vsyncadd [#allocation6], %s44
      %s46 = sshll.u32 [#allocation5], 4
      %s47 = int_to_ptr.vmem [resolvable:$true] %s46
      %52 = dma.hbm_to_vmem [thread:$0]  %s3, 3584, %s47, [#allocation6], 128, 128, 8
    $region17: #{fused_forward.1} parent=1 // pred_fallthru
      _
    // Predicated region
    $region18: #{fused_forward.1} parent=1 // pred_check
      _
    $region19: #{fused_forward.1} parent=1 // pred_check_branch
      %54 = sbr.rel (0) target = $region21
    $region20: #{fused_forward.1} parent=1 // pred_region
      _
    $region21: #{fused_forward.1} parent=1 // pred_fallthru
      _
    // Predicated region
    $region22: #{fused_forward.1} parent=1 // pred_check
      _
    $region23: #{fused_forward.1} parent=1 // pred_check_branch
      %56 = sbr.rel (0) target = $region25
    $region24: #{fused_forward.1} parent=1 // pred_region
      _
    $region25: #{fused_forward.1} parent=1 // pred_fallthru
      _
    // Predicated region
    $region26: #{fused_forward.1} parent=1 // pred_check
      _
    $region27: #{fused_forward.1} parent=1 // pred_check_branch
      %58 = sbr.rel (0) target = $region29
    $region28: #{fused_forward.1} parent=1 // pred_region
      %59 = dma.done [#allocation3], 3072
    $region29: #{fused_forward.1} parent=1 // pred_fallthru
      _
    // Predicated region
    $region30: #{fused_forward.1} parent=1 // pred_check
      _
    $region31: #{fused_forward.1} parent=1 // pred_check_branch
      %61 = sbr.rel (0) target = $region33
    $region32: #{fused_forward.1} parent=1 // pred_region
      %62 = dma.done [#allocation6], 3584
    $region33: #{fused_forward.1} parent=1 // pred_fallthru
      _
    %v63 = vld [vmem:[%s0] sm:$0xff]
    %v64 = vld [vmem:[%s1] sm:$0xff]
    %v65 = vld [vmem:[%s1 + $0x8] sm:$0xff]
    %vm66 = vcmask 130048
    %v68 = vsel %vm66, %v63, 0
    %70 = vmatprep.subr.mxu0 0.0
    %71 = vmatpush1.msra.mxu0 %v64
    %72 = vmatprep.subr.mxu0 0.0
    %73 = vmatpush1.msra.mxu0 %v65
    %74 = vmatprep.subr.mxu0 0.0
    %75 = vmatpush1.msra.mxu0 0.0
    %76 = vmatprep.subr.mxu0 0.0
    %77 = vmatpush1.msra.mxu0 0.0
    %78 = vmatprep.subr.mxu0 0.0
    %79 = vmatpush1.msra.mxu0 0.0
    %80 = vmatprep.subr.mxu0 0.0
    %81 = vmatpush1.msra.mxu0 0.0
    %82 = vmatprep.subr.mxu0 0.0
    %83 = vmatpush1.msra.mxu0 0.0
    %84 = vmatprep.subr.mxu0 0.0
    %85 = vmatpush1.msra.mxu0 0.0
    %86 = vmatprep.subr.mxu0 0.0
    %87 = vmatpush1.msra.mxu0 0.0
    %88 = vmatprep.subr.mxu0 0.0
    %89 = vmatpush1.msra.mxu0 0.0
    %90 = vmatprep.subr.mxu0 0.0
    %91 = vmatpush1.msra.mxu0 0.0
    %92 = vmatprep.subr.mxu0 0.0
    %93 = vmatpush1.msra.mxu0 0.0
    %94 = vmatprep.subr.mxu0 0.0
    %95 = vmatpush1.msra.mxu0 0.0
    %96 = vmatprep.subr.mxu0 0.0
    %97 = vmatpush1.msra.mxu0 0.0
    %98 = vmatprep.subr.mxu0 0.0
    %99 = vmatpush1.msra.mxu0 0.0
    %100 = vmatprep.subr.mxu0 0.0
    %101 = vmatpush1.msra.mxu0 0.0
    %102 = vmatprep.subr.mxu0 0.0
    %103 = vmatpush1.msra.mxu0 0.0
    %104 = vmatprep.subr.mxu0 0.0
    %105 = vmatpush1.msra.mxu0 0.0
    %106 = vmatprep.subr.mxu0 0.0
    %107 = vmatpush1.msra.mxu0 0.0
    %108 = vmatprep.subr.mxu0 0.0
    %109 = vmatpush1.msra.mxu0 0.0
    %110 = vmatprep.subr.mxu0 0.0
    %111 = vmatpush1.msra.mxu0 0.0
    %112 = vmatprep.subr.mxu0 0.0
    %113 = vmatpush1.msra.mxu0 0.0
    %114 = vmatprep.subr.mxu0 0.0
    %115 = vmatpush1.msra.mxu0 0.0
    %116 = vmatprep.subr.mxu0 0.0
    %117 = vmatpush1.msra.mxu0 0.0
    %118 = vmatprep.subr.mxu0 0.0
    %119 = vmatpush1.msra.mxu0 0.0
    %120 = vmatprep.subr.mxu0 0.0
    %121 = vmatpush1.msra.mxu0 0.0
    %122 = vmatprep.subr.mxu0 0.0
    %123 = vmatpush1.msra.mxu0 0.0
    %124 = vmatprep.subr.mxu0 0.0
    %125 = vmatpush1.msra.mxu0 0.0
    %126 = vmatprep.subr.mxu0 0.0
    %127 = vmatpush1.msra.mxu0 0.0
    %128 = vmatprep.subr.mxu0 0.0
    %129 = vmatpush1.msra.mxu0 0.0
    %130 = vmatprep.subr.mxu0 0.0
    %131 = vmatpush1.msra.mxu0 0.0
    %132 = vmatprep.subr.mxu0 0.0
    %133 = vmatpush1.msra.mxu0 0.0
    %134 = vmatprep.mubr.f32.mxu0 0.0
    %135 = vmatmul.mubr.f32.gmra.mrb[0].mxu0 %v68
    %v136 = vpop.f32.mrb[0].mxu0
    %v137 = vadd.f32 0.0, %v136
    %v138 = vpop.f32.mrb[0].mxu0
    %139 = vdwg.mxu0
    %v140 = vtanh.pop %v137
    %vm141 = vcmask 261120
    %142 = vst.msk [vmem:[%s6] sm:$0xff] %vm141, %v137
    %144 = vrot.lane.b32.xlu0 %v140, 96
    %v145 = vpop.permute.xlu0 %144
    %147 = vst.msk [vmem:[%s7] sm:$0xff] %vm141, %v145
    %v148 = vmul.f32 %v140, 1.442695
    %v149 = vpow.pop %v148
    %v150 = vadd.f32 %v149, 2e-08
    %v151 = vrcp.pop %v150
    %v152 = vmul.f32 %v150, %v151
    %v153 = vsub.f32 2.0, %v152
    %v154 = vmul.f32 %v151, %v153
    %156 = vrot.lane.b32.xlu0 %v154, 96
    %v157 = vpop.permute.xlu0 %156
    %v159 = vmul.f32 %v137, %v157
    %v160 = vld [vmem:[#allocation2] sm:$0xff]
    %v161 = vld [vmem:[#allocation2 + $0x8] sm:$0xff]
    %v162 = vld [vmem:[#allocation2 + $0x10] sm:$0xff]
    %v163 = vld [vmem:[#allocation2 + $0x18] sm:$0xff]
    %v164 = vld [vmem:[#allocation2 + $0x20] sm:$0xff]
    %v165 = vld [vmem:[#allocation2 + $0x28] sm:$0xff]
    %v166 = vld [vmem:[#allocation2 + $0x30] sm:$0xff]
    %v167 = vld [vmem:[#allocation2 + $0x38] sm:$0xff]
    %s168 = scalar_lea.vmem %s0, 8
    %v169 = vld [vmem:[%s168] sm:$0xff]
    %s170 = scalar_lea.vmem %s1, 16
    %v171 = vld [vmem:[%s170] sm:$0xff]
    %v172 = vld [vmem:[%s170 + $0x8] sm:$0xff]
    %v174 = vsel %vm66, %v169, 0
    %176 = vmatprep.subr.mxu0 0.0
    %177 = vmatpush1.msra.mxu0 %v171
    %178 = vmatprep.subr.mxu0 0.0
    %179 = vmatpush1.msra.mxu0 %v172
    %180 = vmatprep.subr.mxu0 0.0
    %181 = vmatpush1.msra.mxu0 0.0
    %182 = vmatprep.subr.mxu0 0.0
    %183 = vmatpush1.msra.mxu0 0.0
    %184 = vmatprep.subr.mxu0 0.0
    %185 = vmatpush1.msra.mxu0 0.0
    %186 = vmatprep.subr.mxu0 0.0
    %187 = vmatpush1.msra.mxu0 0.0
    %188 = vmatprep.subr.mxu0 0.0
    %189 = vmatpush1.msra.mxu0 0.0
    %190 = vmatprep.subr.mxu0 0.0
    %191 = vmatpush1.msra.mxu0 0.0
    %192 = vmatprep.subr.mxu0 0.0
    %193 = vmatpush1.msra.mxu0 0.0
    %194 = vmatprep.subr.mxu0 0.0
    %195 = vmatpush1.msra.mxu0 0.0
    %196 = vmatprep.subr.mxu0 0.0
    %197 = vmatpush1.msra.mxu0 0.0
    %198 = vmatprep.subr.mxu0 0.0
    %199 = vmatpush1.msra.mxu0 0.0
    %200 = vmatprep.subr.mxu0 0.0
    %201 = vmatpush1.msra.mxu0 0.0
    %202 = vmatprep.subr.mxu0 0.0
    %203 = vmatpush1.msra.mxu0 0.0
    %204 = vmatprep.subr.mxu0 0.0
    %205 = vmatpush1.msra.mxu0 0.0
    %206 = vmatprep.subr.mxu0 0.0
    %207 = vmatpush1.msra.mxu0 0.0
    %208 = vmatprep.subr.mxu0 0.0
    %209 = vmatpush1.msra.mxu0 0.0
    %210 = vmatprep.subr.mxu0 0.0
    %211 = vmatpush1.msra.mxu0 0.0
    %212 = vmatprep.subr.mxu0 0.0
    %213 = vmatpush1.msra.mxu0 0.0
    %214 = vmatprep.subr.mxu0 0.0
    %215 = vmatpush1.msra.mxu0 0.0
    %216 = vmatprep.subr.mxu0 0.0
    %217 = vmatpush1.msra.mxu0 0.0
    %218 = vmatprep.subr.mxu0 0.0
    %219 = vmatpush1.msra.mxu0 0.0
    %220 = vmatprep.subr.mxu0 0.0
    %221 = vmatpush1.msra.mxu0 0.0
    %222 = vmatprep.subr.mxu0 0.0
    %223 = vmatpush1.msra.mxu0 0.0
    %224 = vmatprep.subr.mxu0 0.0
    %225 = vmatpush1.msra.mxu0 0.0
    %226 = vmatprep.subr.mxu0 0.0
    %227 = vmatpush1.msra.mxu0 0.0
    %228 = vmatprep.subr.mxu0 0.0
    %229 = vmatpush1.msra.mxu0 0.0
    %230 = vmatprep.subr.mxu0 0.0
    %231 = vmatpush1.msra.mxu0 0.0
    %232 = vmatprep.subr.mxu0 0.0
    %233 = vmatpush1.msra.mxu0 0.0
    %234 = vmatprep.subr.mxu0 0.0
    %235 = vmatpush1.msra.mxu0 0.0
    %236 = vmatprep.subr.mxu0 0.0
    %237 = vmatpush1.msra.mxu0 0.0
    %238 = vmatprep.subr.mxu0 0.0
    %239 = vmatpush1.msra.mxu0 0.0
    %240 = vmatprep.mubr.f32.mxu0 0.0
    %241 = vmatmul.mubr.f32.gmra.mrb[0].mxu0 %v174
    %v242 = vpop.f32.mrb[0].mxu0
    %v243 = vadd.f32 0.0, %v242
    %v244 = vpop.f32.mrb[0].mxu0
    %245 = vdwg.mxu0
    %v246 = vtanh.pop %v243
    %248 = vrot.lane.b32.xlu0 %v243, 32
    %v249 = vpop.permute.xlu0 %248
    %vm251 = vcmask 523520
    %252 = vst.msk [vmem:[%s6] sm:$0xff] %vm251, %v249
    %253 = vst.msk [vmem:[%s7] sm:$0xff] %vm251, %v246
    %v254 = vmul.f32 %v246, 1.442695
    %v255 = vpow.pop %v254
    %v256 = vadd.f32 %v255, 2e-08
    %v257 = vrcp.pop %v256
    %v258 = vmul.f32 %v256, %v257
    %v259 = vsub.f32 2.0, %v258
    %v260 = vmul.f32 %v257, %v259
    %262 = vrot.lane.b32.xlu0 %v260, 96
    %v263 = vpop.permute.xlu0 %262
    %v265 = vmul.f32 %v243, %v263
    %s266 = scalar_lea.vmem [#allocation2], 64
    %v267 = vld [vmem:[%s266] sm:$0xff]
    %v268 = vld [vmem:[%s266 + $0x8] sm:$0xff]
    %v269 = vld [vmem:[%s266 + $0x10] sm:$0xff]
    %v270 = vld [vmem:[%s266 + $0x18] sm:$0xff]
    %v271 = vld [vmem:[%s266 + $0x20] sm:$0xff]
    %v272 = vld [vmem:[%s266 + $0x28] sm:$0xff]
    %v273 = vld [vmem:[%s266 + $0x30] sm:$0xff]
    %v274 = vld [vmem:[%s266 + $0x38] sm:$0xff]
    %v275 = vsel %vm141, %v263, 0
    %277 = vmatprep.subr.mxu0 %v268
    %278 = vmatpush1.msra.mxu0 %v267
    %279 = vmatprep.subr.mxu0 %v270
    %280 = vmatpush1.msra.mxu0 %v269
    %281 = vmatprep.subr.mxu0 %v272
    %282 = vmatpush1.msra.mxu0 %v271
    %283 = vmatprep.subr.mxu0 %v274
    %284 = vmatpush1.msra.mxu0 %v273
    %285 = vmatprep.subr.mxu0 0.0
    %286 = vmatpush1.msra.mxu0 0.0
    %287 = vmatprep.subr.mxu0 0.0
    %288 = vmatpush1.msra.mxu0 0.0
    %289 = vmatprep.subr.mxu0 0.0
    %290 = vmatpush1.msra.mxu0 0.0
    %291 = vmatprep.subr.mxu0 0.0
    %292 = vmatpush1.msra.mxu0 0.0
    %293 = vmatprep.subr.mxu0 0.0
    %294 = vmatpush1.msra.mxu0 0.0
    %295 = vmatprep.subr.mxu0 0.0
    %296 = vmatpush1.msra.mxu0 0.0
    %297 = vmatprep.subr.mxu0 0.0
    %298 = vmatpush1.msra.mxu0 0.0
    %299 = vmatprep.subr.mxu0 0.0
    %300 = vmatpush1.msra.mxu0 0.0
    %301 = vmatprep.subr.mxu0 0.0
    %302 = vmatpush1.msra.mxu0 0.0
    %303 = vmatprep.subr.mxu0 0.0
    %304 = vmatpush1.msra.mxu0 0.0
    %305 = vmatprep.subr.mxu0 0.0
    %306 = vmatpush1.msra.mxu0 0.0
    %307 = vmatprep.subr.mxu0 0.0
    %308 = vmatpush1.msra.mxu0 0.0
    %309 = vmatprep.subr.mxu0 0.0
    %310 = vmatpush1.msra.mxu0 0.0
    %311 = vmatprep.subr.mxu0 0.0
    %312 = vmatpush1.msra.mxu0 0.0
    %313 = vmatprep.subr.mxu0 0.0
    %314 = vmatpush1.msra.mxu0 0.0
    %315 = vmatprep.subr.mxu0 0.0
    %316 = vmatpush1.msra.mxu0 0.0
    %317 = vmatprep.subr.mxu0 0.0
    %318 = vmatpush1.msra.mxu0 0.0
    %319 = vmatprep.subr.mxu0 0.0
    %320 = vmatpush1.msra.mxu0 0.0
    %321 = vmatprep.subr.mxu0 0.0
    %322 = vmatpush1.msra.mxu0 0.0
    %323 = vmatprep.subr.mxu0 0.0
    %324 = vmatpush1.msra.mxu0 0.0
    %325 = vmatprep.subr.mxu0 0.0
    %326 = vmatpush1.msra.mxu0 0.0
    %327 = vmatprep.subr.mxu0 0.0
    %328 = vmatpush1.msra.mxu0 0.0
    %329 = vmatprep.subr.mxu0 0.0
    %330 = vmatpush1.msra.mxu0 0.0
    %331 = vmatprep.subr.mxu0 0.0
    %332 = vmatpush1.msra.mxu0 0.0
    %333 = vmatprep.subr.mxu0 0.0
    %334 = vmatpush1.msra.mxu0 0.0
    %335 = vmatprep.subr.mxu0 0.0
    %336 = vmatpush1.msra.mxu0 0.0
    %337 = vmatprep.subr.mxu0 0.0
    %338 = vmatpush1.msra.mxu0 0.0
    %339 = vmatprep.subr.mxu0 0.0
    %340 = vmatpush1.msra.mxu0 0.0
    %341 = vmatprep.mubr.f32.mxu0 0.0
    %342 = vmatmul.mubr.f32.gmra.mrb[0].mxu0 %v275
    %v343 = vpop.f32.mrb[0].mxu0
    %v344 = vadd.f32 0.0, %v343
    %v345 = vpop.f32.mrb[0].mxu0
    %v346 = vadd.f32 0.0, %v345
    %347 = vdwg.mxu0
    %v349 = vsel %vm141, %v265, 0
    %351 = vmatprep.subr.mxu0 %v268
    %352 = vmatpush1.msra.mxu0 %v267
    %353 = vmatprep.subr.mxu0 %v270
    %354 = vmatpush1.msra.mxu0 %v269
    %355 = vmatprep.subr.mxu0 %v272
    %356 = vmatpush1.msra.mxu0 %v271
    %357 = vmatprep.subr.mxu0 %v274
    %358 = vmatpush1.msra.mxu0 %v273
    %359 = vmatprep.subr.mxu0 0.0
    %360 = vmatpush1.msra.mxu0 0.0
    %361 = vmatprep.subr.mxu0 0.0
    %362 = vmatpush1.msra.mxu0 0.0
    %363 = vmatprep.subr.mxu0 0.0
    %364 = vmatpush1.msra.mxu0 0.0
    %365 = vmatprep.subr.mxu0 0.0
    %366 = vmatpush1.msra.mxu0 0.0
    %367 = vmatprep.subr.mxu0 0.0
    %368 = vmatpush1.msra.mxu0 0.0
    %369 = vmatprep.subr.mxu0 0.0
    %370 = vmatpush1.msra.mxu0 0.0
    %371 = vmatprep.subr.mxu0 0.0
    %372 = vmatpush1.msra.mxu0 0.0
    %373 = vmatprep.subr.mxu0 0.0
    %374 = vmatpush1.msra.mxu0 0.0
    %375 = vmatprep.subr.mxu0 0.0
    %376 = vmatpush1.msra.mxu0 0.0
    %377 = vmatprep.subr.mxu0 0.0
    %378 = vmatpush1.msra.mxu0 0.0
    %379 = vmatprep.subr.mxu0 0.0
    %380 = vmatpush1.msra.mxu0 0.0
    %381 = vmatprep.subr.mxu0 0.0
    %382 = vmatpush1.msra.mxu0 0.0
    %383 = vmatprep.subr.mxu0 0.0
    %384 = vmatpush1.msra.mxu0 0.0
    %385 = vmatprep.subr.mxu0 0.0
    %386 = vmatpush1.msra.mxu0 0.0
    %387 = vmatprep.subr.mxu0 0.0
    %388 = vmatpush1.msra.mxu0 0.0
    %389 = vmatprep.subr.mxu0 0.0
    %390 = vmatpush1.msra.mxu0 0.0
    %391 = vmatprep.subr.mxu0 0.0
    %392 = vmatpush1.msra.mxu0 0.0
    %393 = vmatprep.subr.mxu0 0.0
    %394 = vmatpush1.msra.mxu0 0.0
    %395 = vmatprep.subr.mxu0 0.0
    %396 = vmatpush1.msra.mxu0 0.0
    %397 = vmatprep.subr.mxu0 0.0
    %398 = vmatpush1.msra.mxu0 0.0
    %399 = vmatprep.subr.mxu0 0.0
    %400 = vmatpush1.msra.mxu0 0.0
    %401 = vmatprep.subr.mxu0 0.0
    %402 = vmatpush1.msra.mxu0 0.0
    %403 = vmatprep.subr.mxu0 0.0
    %404 = vmatpush1.msra.mxu0 0.0
    %405 = vmatprep.subr.mxu0 0.0
    %406 = vmatpush1.msra.mxu0 0.0
    %407 = vmatprep.subr.mxu0 0.0
    %408 = vmatpush1.msra.mxu0 0.0
    %409 = vmatprep.subr.mxu0 0.0
    %410 = vmatpush1.msra.mxu0 0.0
    %411 = vmatprep.subr.mxu0 0.0
    %412 = vmatpush1.msra.mxu0 0.0
    %413 = vmatprep.subr.mxu0 0.0
    %414 = vmatpush1.msra.mxu0 0.0
    %415 = vmatprep.mubr.f32.mxu0 0.0
    %416 = vmatmul.mubr.f32.gmra.mrb[0].mxu0 %v349
    %v417 = vpop.f32.mrb[0].mxu0
    %v418 = vadd.f32 0.0, %v417
    %v419 = vpop.f32.mrb[0].mxu0
    %v420 = vadd.f32 0.0, %v419
    %421 = vdwg.mxu0
    %v422 = vsel %vm141, %v157, 0
    %424 = vmatprep.subr.mxu0 %v161
    %425 = vmatpush1.msra.mxu0 %v160
    %426 = vmatprep.subr.mxu0 %v163
    %427 = vmatpush1.msra.mxu0 %v162
    %428 = vmatprep.subr.mxu0 %v165
    %429 = vmatpush1.msra.mxu0 %v164
    %430 = vmatprep.subr.mxu0 %v167
    %431 = vmatpush1.msra.mxu0 %v166
    %432 = vmatprep.subr.mxu0 0.0
    %433 = vmatpush1.msra.mxu0 0.0
    %434 = vmatprep.subr.mxu0 0.0
    %435 = vmatpush1.msra.mxu0 0.0
    %436 = vmatprep.subr.mxu0 0.0
    %437 = vmatpush1.msra.mxu0 0.0
    %438 = vmatprep.subr.mxu0 0.0
    %439 = vmatpush1.msra.mxu0 0.0
    %440 = vmatprep.subr.mxu0 0.0
    %441 = vmatpush1.msra.mxu0 0.0
    %442 = vmatprep.subr.mxu0 0.0
    %443 = vmatpush1.msra.mxu0 0.0
    %444 = vmatprep.subr.mxu0 0.0
    %445 = vmatpush1.msra.mxu0 0.0
    %446 = vmatprep.subr.mxu0 0.0
    %447 = vmatpush1.msra.mxu0 0.0
    %448 = vmatprep.subr.mxu0 0.0
    %449 = vmatpush1.msra.mxu0 0.0
    %450 = vmatprep.subr.mxu0 0.0
    %451 = vmatpush1.msra.mxu0 0.0
    %452 = vmatprep.subr.mxu0 0.0
    %453 = vmatpush1.msra.mxu0 0.0
    %454 = vmatprep.subr.mxu0 0.0
    %455 = vmatpush1.msra.mxu0 0.0
    %456 = vmatprep.subr.mxu0 0.0
    %457 = vmatpush1.msra.mxu0 0.0
    %458 = vmatprep.subr.mxu0 0.0
    %459 = vmatpush1.msra.mxu0 0.0
    %460 = vmatprep.subr.mxu0 0.0
    %461 = vmatpush1.msra.mxu0 0.0
    %462 = vmatprep.subr.mxu0 0.0
    %463 = vmatpush1.msra.mxu0 0.0
    %464 = vmatprep.subr.mxu0 0.0
    %465 = vmatpush1.msra.mxu0 0.0
    %466 = vmatprep.subr.mxu0 0.0
    %467 = vmatpush1.msra.mxu0 0.0
    %468 = vmatprep.subr.mxu0 0.0
    %469 = vmatpush1.msra.mxu0 0.0
    %470 = vmatprep.subr.mxu0 0.0
    %471 = vmatpush1.msra.mxu0 0.0
    %472 = vmatprep.subr.mxu0 0.0
    %473 = vmatpush1.msra.mxu0 0.0
    %474 = vmatprep.subr.mxu0 0.0
    %475 = vmatpush1.msra.mxu0 0.0
    %476 = vmatprep.subr.mxu0 0.0
    %477 = vmatpush1.msra.mxu0 0.0
    %478 = vmatprep.subr.mxu0 0.0
    %479 = vmatpush1.msra.mxu0 0.0
    %480 = vmatprep.subr.mxu0 0.0
    %481 = vmatpush1.msra.mxu0 0.0
    %482 = vmatprep.subr.mxu0 0.0
    %483 = vmatpush1.msra.mxu0 0.0
    %484 = vmatprep.subr.mxu0 0.0
    %485 = vmatpush1.msra.mxu0 0.0
    %486 = vmatprep.subr.mxu0 0.0
    %487 = vmatpush1.msra.mxu0 0.0
    %488 = vmatprep.mubr.f32.mxu0 0.0
    %489 = vmatmul.mubr.f32.gmra.mrb[0].mxu0 %v422
    %v490 = vpop.f32.mrb[0].mxu0
    %v491 = vadd.f32 %v344, %v490
    %v492 = vpop.f32.mrb[0].mxu0
    %v493 = vadd.f32 %v346, %v492
    %494 = vdwg.mxu0
    %v496 = vsel %vm141, %v159, 0
    %498 = vmatprep.subr.mxu0 %v161
    %499 = vmatpush1.msra.mxu0 %v160
    %500 = vmatprep.subr.mxu0 %v163
    %501 = vmatpush1.msra.mxu0 %v162
    %502 = vmatprep.subr.mxu0 %v165
    %503 = vmatpush1.msra.mxu0 %v164
    %504 = vmatprep.subr.mxu0 %v167
    %505 = vmatpush1.msra.mxu0 %v166
    %506 = vmatprep.subr.mxu0 0.0
    %507 = vmatpush1.msra.mxu0 0.0
    %508 = vmatprep.subr.mxu0 0.0
    %509 = vmatpush1.msra.mxu0 0.0
    %510 = vmatprep.subr.mxu0 0.0
    %511 = vmatpush1.msra.mxu0 0.0
    %512 = vmatprep.subr.mxu0 0.0
    %513 = vmatpush1.msra.mxu0 0.0
    %514 = vmatprep.subr.mxu0 0.0
    %515 = vmatpush1.msra.mxu0 0.0
    %516 = vmatprep.subr.mxu0 0.0
    %517 = vmatpush1.msra.mxu0 0.0
    %518 = vmatprep.subr.mxu0 0.0
    %519 = vmatpush1.msra.mxu0 0.0
    %520 = vmatprep.subr.mxu0 0.0
    %521 = vmatpush1.msra.mxu0 0.0
    %522 = vmatprep.subr.mxu0 0.0
    %523 = vmatpush1.msra.mxu0 0.0
    %524 = vmatprep.subr.mxu0 0.0
    %525 = vmatpush1.msra.mxu0 0.0
    %526 = vmatprep.subr.mxu0 0.0
    %527 = vmatpush1.msra.mxu0 0.0
    %528 = vmatprep.subr.mxu0 0.0
    %529 = vmatpush1.msra.mxu0 0.0
    %530 = vmatprep.subr.mxu0 0.0
    %531 = vmatpush1.msra.mxu0 0.0
    %532 = vmatprep.subr.mxu0 0.0
    %533 = vmatpush1.msra.mxu0 0.0
    %534 = vmatprep.subr.mxu0 0.0
    %535 = vmatpush1.msra.mxu0 0.0
    %536 = vmatprep.subr.mxu0 0.0
    %537 = vmatpush1.msra.mxu0 0.0
    %538 = vmatprep.subr.mxu0 0.0
    %539 = vmatpush1.msra.mxu0 0.0
    %540 = vmatprep.subr.mxu0 0.0
    %541 = vmatpush1.msra.mxu0 0.0
    %542 = vmatprep.subr.mxu0 0.0
    %543 = vmatpush1.msra.mxu0 0.0
    %544 = vmatprep.subr.mxu0 0.0
    %545 = vmatpush1.msra.mxu0 0.0
    %546 = vmatprep.subr.mxu0 0.0
    %547 = vmatpush1.msra.mxu0 0.0
    %548 = vmatprep.subr.mxu0 0.0
    %549 = vmatpush1.msra.mxu0 0.0
    %550 = vmatprep.subr.mxu0 0.0
    %551 = vmatpush1.msra.mxu0 0.0
    %552 = vmatprep.subr.mxu0 0.0
    %553 = vmatpush1.msra.mxu0 0.0
    %554 = vmatprep.subr.mxu0 0.0
    %555 = vmatpush1.msra.mxu0 0.0
    %556 = vmatprep.subr.mxu0 0.0
    %557 = vmatpush1.msra.mxu0 0.0
    %558 = vmatprep.subr.mxu0 0.0
    %559 = vmatpush1.msra.mxu0 0.0
    %560 = vmatprep.subr.mxu0 0.0
    %561 = vmatpush1.msra.mxu0 0.0
    %562 = vmatprep.mubr.f32.mxu0 0.0
    %563 = vmatmul.mubr.f32.gmra.mrb[0].mxu0 %v496
    %v564 = vpop.f32.mrb[0].mxu0
    %v565 = vadd.f32 %v418, %v564
    %v566 = vpop.f32.mrb[0].mxu0
    %v567 = vadd.f32 %v420, %v566
    %568 = vdwg.mxu0
    %s569 = scalar_lea.vmem %s0, 16
    %v570 = vld [vmem:[%s569] sm:$0xff]
    %s571 = scalar_lea.vmem %s1, 32
    %v572 = vld [vmem:[%s571] sm:$0xff]
    %v573 = vld [vmem:[%s571 + $0x8] sm:$0xff]
    %v575 = vsel %vm66, %v570, 0
    %577 = vmatprep.subr.mxu0 0.0
    %578 = vmatpush1.msra.mxu0 %v572
    %579 = vmatprep.subr.mxu0 0.0
    %580 = vmatpush1.msra.mxu0 %v573
    %581 = vmatprep.subr.mxu0 0.0
    %582 = vmatpush1.msra.mxu0 0.0
    %583 = vmatprep.subr.mxu0 0.0
    %584 = vmatpush1.msra.mxu0 0.0
    %585 = vmatprep.subr.mxu0 0.0
    %586 = vmatpush1.msra.mxu0 0.0
    %587 = vmatprep.subr.mxu0 0.0
    %588 = vmatpush1.msra.mxu0 0.0
    %589 = vmatprep.subr.mxu0 0.0
    %590 = vmatpush1.msra.mxu0 0.0
    %591 = vmatprep.subr.mxu0 0.0
    %592 = vmatpush1.msra.mxu0 0.0
    %593 = vmatprep.subr.mxu0 0.0
    %594 = vmatpush1.msra.mxu0 0.0
    %595 = vmatprep.subr.mxu0 0.0
    %596 = vmatpush1.msra.mxu0 0.0
    %597 = vmatprep.subr.mxu0 0.0
    %598 = vmatpush1.msra.mxu0 0.0
    %599 = vmatprep.subr.mxu0 0.0
    %600 = vmatpush1.msra.mxu0 0.0
    %601 = vmatprep.subr.mxu0 0.0
    %602 = vmatpush1.msra.mxu0 0.0
    %603 = vmatprep.subr.mxu0 0.0
    %604 = vmatpush1.msra.mxu0 0.0
    %605 = vmatprep.subr.mxu0 0.0
    %606 = vmatpush1.msra.mxu0 0.0
    %607 = vmatprep.subr.mxu0 0.0
    %608 = vmatpush1.msra.mxu0 0.0
    %609 = vmatprep.subr.mxu0 0.0
    %610 = vmatpush1.msra.mxu0 0.0
    %611 = vmatprep.subr.mxu0 0.0
    %612 = vmatpush1.msra.mxu0 0.0
    %613 = vmatprep.subr.mxu0 0.0
    %614 = vmatpush1.msra.mxu0 0.0
    %615 = vmatprep.subr.mxu0 0.0
    %616 = vmatpush1.msra.mxu0 0.0
    %617 = vmatprep.subr.mxu0 0.0
    %618 = vmatpush1.msra.mxu0 0.0
    %619 = vmatprep.subr.mxu0 0.0
    %620 = vmatpush1.msra.mxu0 0.0
    %621 = vmatprep.subr.mxu0 0.0
    %622 = vmatpush1.msra.mxu0 0.0
    %623 = vmatprep.subr.mxu0 0.0
    %624 = vmatpush1.msra.mxu0 0.0
    %625 = vmatprep.subr.mxu0 0.0
    %626 = vmatpush1.msra.mxu0 0.0
    %627 = vmatprep.subr.mxu0 0.0
    %628 = vmatpush1.msra.mxu0 0.0
    %629 = vmatprep.subr.mxu0 0.0
    %630 = vmatpush1.msra.mxu0 0.0
    %631 = vmatprep.subr.mxu0 0.0
    %632 = vmatpush1.msra.mxu0 0.0
    %633 = vmatprep.subr.mxu0 0.0
    %634 = vmatpush1.msra.mxu0 0.0
    %635 = vmatprep.subr.mxu0 0.0
    %636 = vmatpush1.msra.mxu0 0.0
    %637 = vmatprep.subr.mxu0 0.0
    %638 = vmatpush1.msra.mxu0 0.0
    %639 = vmatprep.subr.mxu0 0.0
    %640 = vmatpush1.msra.mxu0 0.0
    %641 = vmatprep.mubr.f32.mxu0 0.0
    %642 = vmatmul.mubr.f32.gmra.mrb[0].mxu0 %v575
    %v643 = vpop.f32.mrb[0].mxu0
    %v644 = vadd.f32 0.0, %v643
    %v645 = vpop.f32.mrb[0].mxu0
    %646 = vdwg.mxu0
    %v647 = vtanh.pop %v644
    %649 = vrot.lane.b32.xlu0 %v644, 64
    %v650 = vpop.permute.xlu0 %649
    %vm652 = vcmask 785920
    %653 = vst.msk [vmem:[%s6] sm:$0xff] %vm652, %v650
    %655 = vrot.lane.b32.xlu0 %v647, 32
    %v656 = vpop.permute.xlu0 %655
    %658 = vst.msk [vmem:[%s7] sm:$0xff] %vm652, %v656
    %v659 = vmul.f32 %v647, 1.442695
    %v660 = vpow.pop %v659
    %v661 = vadd.f32 %v660, 2e-08
    %v662 = vrcp.pop %v661
    %v663 = vmul.f32 %v661, %v662
    %v664 = vsub.f32 2.0, %v663
    %v665 = vmul.f32 %v662, %v664
    %667 = vrot.lane.b32.xlu0 %v665, 96
    %v668 = vpop.permute.xlu0 %667
    %v670 = vmul.f32 %v644, %v668
    %s671 = scalar_lea.vmem [#allocation2], 128
    %v672 = vld [vmem:[%s671] sm:$0xff]
    %v673 = vld [vmem:[%s671 + $0x8] sm:$0xff]
    %v674 = vld [vmem:[%s671 + $0x10] sm:$0xff]
    %v675 = vld [vmem:[%s671 + $0x18] sm:$0xff]
    %v676 = vld [vmem:[%s671 + $0x20] sm:$0xff]
    %v677 = vld [vmem:[%s671 + $0x28] sm:$0xff]
    %v678 = vld [vmem:[%s671 + $0x30] sm:$0xff]
    %v679 = vld [vmem:[%s671 + $0x38] sm:$0xff]
    %v680 = vsel %vm141, %v668, 0
    %682 = vmatprep.subr.mxu0 %v673
    %683 = vmatpush1.msra.mxu0 %v672
    %684 = vmatprep.subr.mxu0 %v675
    %685 = vmatpush1.msra.mxu0 %v674
    %686 = vmatprep.subr.mxu0 %v677
    %687 = vmatpush1.msra.mxu0 %v676
    %688 = vmatprep.subr.mxu0 %v679
    %689 = vmatpush1.msra.mxu0 %v678
    %690 = vmatprep.subr.mxu0 0.0
    %691 = vmatpush1.msra.mxu0 0.0
    %692 = vmatprep.subr.mxu0 0.0
    %693 = vmatpush1.msra.mxu0 0.0
    %694 = vmatprep.subr.mxu0 0.0
    %695 = vmatpush1.msra.mxu0 0.0
    %696 = vmatprep.subr.mxu0 0.0
    %697 = vmatpush1.msra.mxu0 0.0
    %698 = vmatprep.subr.mxu0 0.0
    %699 = vmatpush1.msra.mxu0 0.0
    %700 = vmatprep.subr.mxu0 0.0
    %701 = vmatpush1.msra.mxu0 0.0
    %702 = vmatprep.subr.mxu0 0.0
    %703 = vmatpush1.msra.mxu0 0.0
    %704 = vmatprep.subr.mxu0 0.0
    %705 = vmatpush1.msra.mxu0 0.0
    %706 = vmatprep.subr.mxu0 0.0
    %707 = vmatpush1.msra.mxu0 0.0
    %708 = vmatprep.subr.mxu0 0.0
    %709 = vmatpush1.msra.mxu0 0.0
    %710 = vmatprep.subr.mxu0 0.0
    %711 = vmatpush1.msra.mxu0 0.0
    %712 = vmatprep.subr.mxu0 0.0
    %713 = vmatpush1.msra.mxu0 0.0
    %714 = vmatprep.subr.mxu0 0.0
    %715 = vmatpush1.msra.mxu0 0.0
    %716 = vmatprep.subr.mxu0 0.0
    %717 = vmatpush1.msra.mxu0 0.0
    %718 = vmatprep.subr.mxu0 0.0
    %719 = vmatpush1.msra.mxu0 0.0
    %720 = vmatprep.subr.mxu0 0.0
    %721 = vmatpush1.msra.mxu0 0.0
    %722 = vmatprep.subr.mxu0 0.0
    %723 = vmatpush1.msra.mxu0 0.0
    %724 = vmatprep.subr.mxu0 0.0
    %725 = vmatpush1.msra.mxu0 0.0
    %726 = vmatprep.subr.mxu0 0.0
    %727 = vmatpush1.msra.mxu0 0.0
    %728 = vmatprep.subr.mxu0 0.0
    %729 = vmatpush1.msra.mxu0 0.0
    %730 = vmatprep.subr.mxu0 0.0
    %731 = vmatpush1.msra.mxu0 0.0
    %732 = vmatprep.subr.mxu0 0.0
    %733 = vmatpush1.msra.mxu0 0.0
    %734 = vmatprep.subr.mxu0 0.0
    %735 = vmatpush1.msra.mxu0 0.0
    %736 = vmatprep.subr.mxu0 0.0
    %737 = vmatpush1.msra.mxu0 0.0
    %738 = vmatprep.subr.mxu0 0.0
    %739 = vmatpush1.msra.mxu0 0.0
    %740 = vmatprep.subr.mxu0 0.0
    %741 = vmatpush1.msra.mxu0 0.0
    %742 = vmatprep.subr.mxu0 0.0
    %743 = vmatpush1.msra.mxu0 0.0
    %744 = vmatprep.subr.mxu0 0.0
    %745 = vmatpush1.msra.mxu0 0.0
    %746 = vmatprep.mubr.f32.mxu0 0.0
    %747 = vmatmul.mubr.f32.gmra.mrb[0].mxu0 %v680
    %v748 = vpop.f32.mrb[0].mxu0
    %v749 = vadd.f32 0.0, %v748
    %v750 = vpop.f32.mrb[0].mxu0
    %v751 = vadd.f32 0.0, %v750
    %752 = vdwg.mxu0
    %v754 = vsel %vm141, %v670, 0
    %756 = vmatprep.subr.mxu0 %v673
    %757 = vmatpush1.msra.mxu0 %v672
    %758 = vmatprep.subr.mxu0 %v675
    %759 = vmatpush1.msra.mxu0 %v674
    %760 = vmatprep.subr.mxu0 %v677
    %761 = vmatpush1.msra.mxu0 %v676
    %762 = vmatprep.subr.mxu0 %v679
    %763 = vmatpush1.msra.mxu0 %v678
    %764 = vmatprep.subr.mxu0 0.0
    %765 = vmatpush1.msra.mxu0 0.0
    %766 = vmatprep.subr.mxu0 0.0
    %767 = vmatpush1.msra.mxu0 0.0
    %768 = vmatprep.subr.mxu0 0.0
    %769 = vmatpush1.msra.mxu0 0.0
    %770 = vmatprep.subr.mxu0 0.0
    %771 = vmatpush1.msra.mxu0 0.0
    %772 = vmatprep.subr.mxu0 0.0
    %773 = vmatpush1.msra.mxu0 0.0
    %774 = vmatprep.subr.mxu0 0.0
    %775 = vmatpush1.msra.mxu0 0.0
    %776 = vmatprep.subr.mxu0 0.0
    %777 = vmatpush1.msra.mxu0 0.0
    %778 = vmatprep.subr.mxu0 0.0
    %779 = vmatpush1.msra.mxu0 0.0
    %780 = vmatprep.subr.mxu0 0.0
    %781 = vmatpush1.msra.mxu0 0.0
    %782 = vmatprep.subr.mxu0 0.0
    %783 = vmatpush1.msra.mxu0 0.0
    %784 = vmatprep.subr.mxu0 0.0
    %785 = vmatpush1.msra.mxu0 0.0
    %786 = vmatprep.subr.mxu0 0.0
    %787 = vmatpush1.msra.mxu0 0.0
    %788 = vmatprep.subr.mxu0 0.0
    %789 = vmatpush1.msra.mxu0 0.0
    %790 = vmatprep.subr.mxu0 0.0
    %791 = vmatpush1.msra.mxu0 0.0
    %792 = vmatprep.subr.mxu0 0.0
    %793 = vmatpush1.msra.mxu0 0.0
    %794 = vmatprep.subr.mxu0 0.0
    %795 = vmatpush1.msra.mxu0 0.0
    %796 = vmatprep.subr.mxu0 0.0
    %797 = vmatpush1.msra.mxu0 0.0
    %798 = vmatprep.subr.mxu0 0.0
    %799 = vmatpush1.msra.mxu0 0.0
    %800 = vmatprep.subr.mxu0 0.0
    %801 = vmatpush1.msra.mxu0 0.0
    %802 = vmatprep.subr.mxu0 0.0
    %803 = vmatpush1.msra.mxu0 0.0
    %804 = vmatprep.subr.mxu0 0.0
    %805 = vmatpush1.msra.mxu0 0.0
    %806 = vmatprep.subr.mxu0 0.0
    %807 = vmatpush1.msra.mxu0 0.0
    %808 = vmatprep.subr.mxu0 0.0
    %809 = vmatpush1.msra.mxu0 0.0
    %810 = vmatprep.subr.mxu0 0.0
    %811 = vmatpush1.msra.mxu0 0.0
    %812 = vmatprep.subr.mxu0 0.0
    %813 = vmatpush1.msra.mxu0 0.0
    %814 = vmatprep.subr.mxu0 0.0
    %815 = vmatpush1.msra.mxu0 0.0
    %816 = vmatprep.subr.mxu0 0.0
    %817 = vmatpush1.msra.mxu0 0.0
    %818 = vmatprep.subr.mxu0 0.0
    %819 = vmatpush1.msra.mxu0 0.0
    %820 = vmatprep.mubr.f32.mxu0 0.0
    %821 = vmatmul.mubr.f32.gmra.mrb[0].mxu0 %v754
    %v822 = vpop.f32.mrb[0].mxu0
    %v823 = vadd.f32 0.0, %v822
    %v824 = vpop.f32.mrb[0].mxu0
    %v825 = vadd.f32 0.0, %v824
    %826 = vdwg.mxu0
    %v827 = vadd.f32 %v491, %v749
    %v828 = vadd.f32 %v493, %v751
    %v829 = vadd.f32 %v565, %v823
    %v830 = vadd.f32 %v567, %v825
    %v831 = vrcp.pop %v827
    %v832 = vrcp.pop %v828
    %v833 = vmul.f32 %v827, %v831
    %v834 = vmul.f32 %v828, %v832
    %v835 = vsub.f32 2.0, %v833
    %v836 = vsub.f32 2.0, %v834
    %v837 = vmul.f32 %v831, %v835
    %v838 = vmul.f32 %v832, %v836
    %v839 = vmul.f32 %v829, %v837
    %v840 = vmul.f32 %v830, %v838
    %v841 = vadd.f32 %v837, 1e-08
    %v842 = vadd.f32 %v838, 1e-08
    %v843 = vlog2.pop %v841
    %v844 = vmul.f32 %v843, 0.6931472
    %v845 = vlog2.pop %v842
    %v846 = vmul.f32 %v845, 0.6931472
    %847 = vst [vmem:[%s8] sm:$0xff] %v839
    %vm848 = vcmask 785408
    %849 = vst.msk [vmem:[%s8 + $0x8] sm:$0xff] %vm848, %v840
    %850 = vst [vmem:[%s9] sm:$0xff] %v844
    %851 = vst.msk [vmem:[%s9 + $0x8] sm:$0xff] %vm848, %v846
    %vm852 = vcmask 253952
    %853 = vst.msk [vmem:[#allocation7] sm:$0x1] %vm852, %v839
    %854 = vst.msk [vmem:[#allocation8] sm:$0x1] %vm852, %v844
    %v855 = vld [vmem:[%s5] sm:$0x1]
    %v856 = vmul.f32 %v844, 0.5
    %v857 = vmul.f32 %v856, 1.442695
    %v858 = vpow.pop %v857
    %v859 = vmul.f32 %v855, %v858
    %v860 = vadd.f32 %v839, %v859
    %861 = vst.msk [vmem:[#allocation10] sm:$0x1] %vm852, %v860
    %863 = vrot.lane.b32.xlu0 %v839, 96
    %v864 = vpop.permute.xlu0 %863
    %vm866 = vcmask 254977
    %867 = vst.msk [vmem:[#allocation7] sm:$0x2] %vm866, %v864
    %869 = vrot.lane.b32.xlu0 %v844, 96
    %v870 = vpop.permute.xlu0 %869
    %872 = vst.msk [vmem:[#allocation8] sm:$0x2] %vm866, %v870
    %v873 = vld [vmem:[%s5 + $0x1] sm:$0x1]
    %v875 = vrot.slane %v858, 1
    %876 = vrot.lane.b32.xlu0 %v875, 96
    %v877 = vpop.permute.xlu0 %876
    %v879 = vmul.f32 %v873, %v877
    %v881 = vrot.slane %v879, 7
    %882 = vrot.lane.b32.xlu0 %v881, 32
    %v883 = vpop.permute.xlu0 %882
    %v885 = vadd.f32 %v839, %v883
    %887 = vrot.lane.b32.xlu0 %v885, 96
    %v888 = vpop.permute.xlu0 %887
    %890 = vst.msk [vmem:[#allocation10] sm:$0x2] %vm866, %v888
    %891 = vrot.lane.b32.xlu0 %v839, 64
    %v892 = vpop.permute.xlu0 %891
    %vm894 = vcmask 256002
    %895 = vst.msk [vmem:[#allocation7] sm:$0x4] %vm894, %v892
    %896 = vrot.lane.b32.xlu0 %v844, 64
    %v897 = vpop.permute.xlu0 %896
    %899 = vst.msk [vmem:[#allocation8] sm:$0x4] %vm894, %v897
    %v900 = vld [vmem:[%s5 + $0x2] sm:$0x1]
    %v901 = vrot.slane %v858, 2
    %902 = vrot.lane.b32.xlu0 %v901, 64
    %v903 = vpop.permute.xlu0 %902
    %v905 = vmul.f32 %v900, %v903
    %v907 = vrot.slane %v905, 6
    %908 = vrot.lane.b32.xlu0 %v907, 64
    %v909 = vpop.permute.xlu0 %908
    %v911 = vadd.f32 %v839, %v909
    %913 = vrot.lane.b32.xlu0 %v911, 64
    %v914 = vpop.permute.xlu0 %913
    %916 = vst.msk [vmem:[#allocation10] sm:$0x4] %vm894, %v914
    %917 = vrot.lane.b32.xlu0 %v839, 32
    %v918 = vpop.permute.xlu0 %917
    %vm920 = vcmask 257027
    %921 = vst.msk [vmem:[#allocation7] sm:$0x8] %vm920, %v918
    %922 = vrot.lane.b32.xlu0 %v844, 32
    %v923 = vpop.permute.xlu0 %922
    %925 = vst.msk [vmem:[#allocation8] sm:$0x8] %vm920, %v923
    %v926 = vld [vmem:[%s5 + $0x3] sm:$0x1]
    %v927 = vrot.slane %v858, 3
    %928 = vrot.lane.b32.xlu0 %v927, 32
    %v929 = vpop.permute.xlu0 %928
    %v931 = vmul.f32 %v926, %v929
    %v933 = vrot.slane %v931, 5
    %934 = vrot.lane.b32.xlu0 %v933, 96
    %v935 = vpop.permute.xlu0 %934
    %v937 = vadd.f32 %v839, %v935
    %939 = vrot.lane.b32.xlu0 %v937, 32
    %v940 = vpop.permute.xlu0 %939
    %942 = vst.msk [vmem:[#allocation10] sm:$0x8] %vm920, %v940
    %vm943 = vcmask 258052
    %944 = vst.msk [vmem:[#allocation7] sm:$0x10] %vm943, %v840
    %945 = vst.msk [vmem:[#allocation8] sm:$0x10] %vm943, %v846
    %v946 = vld [vmem:[%s5 + $0x4] sm:$0x1]
    %v947 = vmul.f32 %v846, 0.5
    %v948 = vmul.f32 %v947, 1.442695
    %v949 = vpow.pop %v948
    %v951 = vrot.slane %v949, 4
    %v953 = vmul.f32 %v946, %v951
    %v955 = vrot.slane %v953, 4
    %v957 = vadd.f32 %v840, %v955
    %958 = vst.msk [vmem:[#allocation10] sm:$0x10] %vm943, %v957
    %960 = vrot.lane.b32.xlu0 %v840, 96
    %v961 = vpop.permute.xlu0 %960
    %vm963 = vcmask 259077
    %964 = vst.msk [vmem:[#allocation7] sm:$0x20] %vm963, %v961
    %966 = vrot.lane.b32.xlu0 %v846, 96
    %v967 = vpop.permute.xlu0 %966
    %969 = vst.msk [vmem:[#allocation8] sm:$0x20] %vm963, %v967
    %v970 = vld [vmem:[%s5 + $0x5] sm:$0x1]
    %v971 = vrot.slane %v949, 5
    %972 = vrot.lane.b32.xlu0 %v971, 96
    %v973 = vpop.permute.xlu0 %972
    %v975 = vmul.f32 %v970, %v973
    %v977 = vrot.slane %v975, 3
    %978 = vrot.lane.b32.xlu0 %v977, 32
    %v979 = vpop.permute.xlu0 %978
    %v981 = vadd.f32 %v840, %v979
    %983 = vrot.lane.b32.xlu0 %v981, 96
    %v984 = vpop.permute.xlu0 %983
    %986 = vst.msk [vmem:[#allocation10] sm:$0x20] %vm963, %v984
    %987 = vrot.lane.b32.xlu0 %v840, 64
    %v988 = vpop.permute.xlu0 %987
    %vm990 = vcmask 261126
    %991 = vst.msk [vmem:[#allocation7] sm:$0xc0] %vm990, %v988
    %992 = vrot.lane.b32.xlu0 %v846, 64
    %v993 = vpop.permute.xlu0 %992
    %995 = vst.msk [vmem:[#allocation8] sm:$0xc0] %vm990, %v993
    %v996 = vld [vmem:[%s5 + $0x6] sm:$0x3]
    %v997 = vrot.slane %v949, 6
    %998 = vrot.lane.b32.xlu0 %v997, 64
    %v999 = vpop.permute.xlu0 %998
    %v1001 = vmul.f32 %v996, %v999
    %v1003 = vrot.slane %v1001, 2
    %1004 = vrot.lane.b32.xlu0 %v1003, 64
    %v1005 = vpop.permute.xlu0 %1004
    %v1007 = vadd.f32 %v840, %v1005
    %1009 = vrot.lane.b32.xlu0 %v1007, 64
    %v1010 = vpop.permute.xlu0 %1009
    %1012 = vst.msk [vmem:[#allocation10] sm:$0xc0] %vm990, %v1010
    %v1013 = vadd.f32 %v844, 1.0
    %v1014 = vadd.f32 %v846, 1.0
    %v1015 = vsub.f32 %v1013, %v841
    %v1016 = vsub.f32 %v1014, %v842
    %v1017 = vmul.f32 %v839, %v839
    %v1018 = vmul.f32 %v840, %v840
    %v1019 = vsub.f32 %v1015, %v1017
    %v1020 = vsub.f32 %v1016, %v1018
    %v1021 = vld [vmem:[#allocation5] sm:$0xff]
    %v1022 = vld [vmem:[#allocation5 + $0x8] sm:$0xff]
    %v1023 = vld [vmem:[#allocation5 + $0x10] sm:$0xff]
    %v1024 = vld [vmem:[#allocation5 + $0x18] sm:$0xff]
    %v1025 = vld [vmem:[#allocation5 + $0x20] sm:$0xff]
    %v1026 = vld [vmem:[#allocation5 + $0x28] sm:$0xff]
    %v1027 = vld [vmem:[#allocation5 + $0x30] sm:$0xff]
    %v1028 = vld [vmem:[#allocation5 + $0x38] sm:$0xff]
    %v1029 = vld [vmem:[#allocation5 + $0x40] sm:$0xff]
    %v1030 = vld [vmem:[#allocation5 + $0x48] sm:$0xff]
    %v1031 = vld [vmem:[#allocation5 + $0x50] sm:$0xff]
    %v1032 = vld [vmem:[#allocation5 + $0x58] sm:$0xff]
    %v1033 = vld [vmem:[#allocation5 + $0x60] sm:$0xff]
    %v1034 = vld [vmem:[#allocation5 + $0x68] sm:$0xff]
    %v1035 = vld [vmem:[#allocation5 + $0x70] sm:$0xff]
    %v1036 = vld [vmem:[#allocation5 + $0x78] sm:$0xff]
    %v1037 = vld [vmem:[#allocation5 + $0x80] sm:$0xff]
    %v1038 = vld [vmem:[#allocation5 + $0x88] sm:$0xff]
    %v1039 = vld [vmem:[#allocation5 + $0x90] sm:$0xff]
    %v1040 = vld [vmem:[#allocation5 + $0x98] sm:$0xff]
    %v1041 = vld [vmem:[#allocation5 + $0xa0] sm:$0xff]
    %v1042 = vld [vmem:[#allocation5 + $0xa8] sm:$0xff]
    %v1043 = vld [vmem:[#allocation5 + $0xb0] sm:$0xff]
    %v1044 = vld [vmem:[#allocation5 + $0xb8] sm:$0xff]
    %v1045 = vld [vmem:[#allocation5 + $0xc0] sm:$0xff]
    %v1046 = vld [vmem:[#allocation5 + $0xc8] sm:$0xff]
    %v1047 = vld [vmem:[#allocation5 + $0xd0] sm:$0xff]
    %v1048 = vld [vmem:[#allocation5 + $0xd8] sm:$0xff]
    %v1050 = vsel %vm848, %v1020, 0
    %1052 = vmatprep.subr.mxu0 0.0
    %1053 = vmatpush1.msra.mxu0 %v1021
    %1054 = vmatprep.subr.mxu0 0.0
    %1055 = vmatpush1.msra.mxu0 %v1022
    %1056 = vmatprep.subr.mxu0 0.0
    %1057 = vmatpush1.msra.mxu0 %v1023
    %1058 = vmatprep.subr.mxu0 0.0
    %1059 = vmatpush1.msra.mxu0 %v1024
    %1060 = vmatprep.subr.mxu0 0.0
    %1061 = vmatpush1.msra.mxu0 %v1025
    %1062 = vmatprep.subr.mxu0 0.0
    %1063 = vmatpush1.msra.mxu0 %v1026
    %1064 = vmatprep.subr.mxu0 0.0
    %1065 = vmatpush1.msra.mxu0 %v1027
    %1066 = vmatprep.subr.mxu0 0.0
    %1067 = vmatpush1.msra.mxu0 %v1028
    %1068 = vmatprep.subr.mxu0 0.0
    %1069 = vmatpush1.msra.mxu0 %v1029
    %1070 = vmatprep.subr.mxu0 0.0
    %1071 = vmatpush1.msra.mxu0 %v1030
    %1072 = vmatprep.subr.mxu0 0.0
    %1073 = vmatpush1.msra.mxu0 %v1031
    %1074 = vmatprep.subr.mxu0 0.0
    %1075 = vmatpush1.msra.mxu0 %v1032
    %1076 = vmatprep.subr.mxu0 0.0
    %1077 = vmatpush1.msra.mxu0 %v1033
    %1078 = vmatprep.subr.mxu0 0.0
    %1079 = vmatpush1.msra.mxu0 %v1034
    %1080 = vmatprep.subr.mxu0 0.0
    %1081 = vmatpush1.msra.mxu0 %v1035
    %1082 = vmatprep.subr.mxu0 0.0
    %1083 = vmatpush1.msra.mxu0 %v1036
    %1084 = vmatprep.subr.mxu0 0.0
    %1085 = vmatpush1.msra.mxu0 %v1037
    %1086 = vmatprep.subr.mxu0 0.0
    %1087 = vmatpush1.msra.mxu0 %v1038
    %1088 = vmatprep.subr.mxu0 0.0
    %1089 = vmatpush1.msra.mxu0 %v1039
    %1090 = vmatprep.subr.mxu0 0.0
    %1091 = vmatpush1.msra.mxu0 %v1040
    %1092 = vmatprep.subr.mxu0 0.0
    %1093 = vmatpush1.msra.mxu0 %v1041
    %1094 = vmatprep.subr.mxu0 0.0
    %1095 = vmatpush1.msra.mxu0 %v1042
    %1096 = vmatprep.subr.mxu0 0.0
    %1097 = vmatpush1.msra.mxu0 %v1043
    %1098 = vmatprep.subr.mxu0 0.0
    %1099 = vmatpush1.msra.mxu0 %v1044
    %1100 = vmatprep.subr.mxu0 0.0
    %1101 = vmatpush1.msra.mxu0 %v1045
    %1102 = vmatprep.subr.mxu0 0.0
    %1103 = vmatpush1.msra.mxu0 %v1046
    %1104 = vmatprep.subr.mxu0 0.0
    %1105 = vmatpush1.msra.mxu0 %v1047
    %1106 = vmatprep.subr.mxu0 0.0
    %1107 = vmatpush1.msra.mxu0 %v1048
    %1108 = vmatprep.subr.mxu0 0.0
    %1109 = vmatpush1.msra.mxu0 0.0
    %1110 = vmatprep.subr.mxu0 0.0
    %1111 = vmatpush1.msra.mxu0 0.0
    %1112 = vmatprep.subr.mxu0 0.0
    %1113 = vmatpush1.msra.mxu0 0.0
    %1114 = vmatprep.subr.mxu0 0.0
    %1115 = vmatpush1.msra.mxu0 0.0
    %1116 = vmatprep.mubr.f32.mxu0 %v1050
    %1117 = vmatmul.mubr.f32.gmra.mrb[0].mxu0 %v1019
    %v1118 = vpop.f32.mrb[0].mxu0
    %v1119 = vadd.f32 0.0, %v1118
    %v1120 = vpop.f32.mrb[0].mxu0
    %1121 = vdwg.mxu0
    %vm1122 = vcmask 56320
    %v1123 = vsel %vm1122, %v1119, 0.0
    %v1124 = vrot.slane %v1123, 4
    %v1125 = vadd.f32 %v1123, %v1124
    %v1126 = vrot.slane %v1125, 2
    %v1127 = vadd.f32 %v1125, %v1126
    %v1128 = vrot.slane %v1127, 1
    %v1129 = vadd.f32 %v1127, %v1128
    %v1130 = vmul.f32 %v1129, -0.0625
    %vm1131 = vcmask 49152
    %1132 = vst.msk [vmem:[#allocation11] sm:$0x1] %vm1131, %v1130
    %v1133 = vld [vmem:[%s4] sm:$0x1]
    %v1134 = vmul.f32 %v1133, %v1130
    %v1135 = vsel %vm1131, %v1134, 0.0
    %1136 = vadd.xlane.f32.xlu0 %v1135
    %v1137 = vpop.xlane.xlu0 %1136
    %vm1138 = vcmask 0
    %1139 = vst.msk [vmem:[#allocation13] sm:$0x1] %vm1138, %v1137
    // Predicated region
    $region34: #{fused_forward.1} parent=1 // pred_check
      _
    $region35: #{fused_forward.1} parent=1 // pred_check_branch
      %1141 = sbr.rel (0) target = $region37
    $region36: #{fused_forward.1} parent=1 // pred_region
      _
    $region37: #{fused_forward.1} parent=1 // pred_fallthru
      _
    // Predicated region
    $region38: #{fused_forward.1} parent=1 // pred_check
      _
    $region39: #{fused_forward.1} parent=1 // pred_check_branch
      %1143 = sbr.rel (0) target = $region41
    $region40: #{fused_forward.1} parent=1 // pred_region
      _
    $region41: #{fused_forward.1} parent=1 // pred_fallthru
      _
    // Predicated region
    $region42: #{fused_forward.1} parent=1 // pred_check
      _
    $region43: #{fused_forward.1} parent=1 // pred_check_branch
      %1145 = sbr.rel (0) target = $region45
    $region44: #{fused_forward.1} parent=1 // pred_region
      _
    $region45: #{fused_forward.1} parent=1 // pred_fallthru
      _
    // Predicated region
    $region46: #{fused_forward.1} parent=1 // pred_check
      _
    $region47: #{fused_forward.1} parent=1 // pred_check_branch
      %1147 = sbr.rel (0) target = $region49
    $region48: #{fused_forward.1} parent=1 // pred_region
      _
    $region49: #{fused_forward.1} parent=1 // pred_fallthru
      _
    // Predicated region
    $region50: #{fused_forward.1} parent=1 // pred_check
      _
    $region51: #{fused_forward.1} parent=1 // pred_check_branch
      %1149 = sbr.rel (0) target = $region53
    $region52: #{fused_forward.1} parent=1 // pred_region
      %s1151 = ssub.s32 128, 128
      %1152 = vsyncadd [#allocation4], %s1151
      %s1154 = sshll.u32 [#allocation7], 4
      %s1155 = int_to_ptr.vmem [resolvable:$true] %s1154
      %1157 = dma.vmem_to_hbm [thread:$0]  %s1155, 128, %s10, [#allocation4]
    $region53: #{fused_forward.1} parent=1 // pred_fallthru
      _
    // Predicated region
    $region54: #{fused_forward.1} parent=1 // pred_check
      _
    $region55: #{fused_forward.1} parent=1 // pred_check_branch
      %1159 = sbr.rel (0) target = $region57
    $region56: #{fused_forward.1} parent=1 // pred_region
      %s1161 = ssub.s32 128, 128
      %1162 = vsyncadd [#allocation9], %s1161
      %s1164 = sshll.u32 [#allocation8], 4
      %s1165 = int_to_ptr.vmem [resolvable:$true] %s1164
      %1167 = dma.vmem_to_hbm [thread:$0]  %s1165, 128, %s11, [#allocation9]
    $region57: #{fused_forward.1} parent=1 // pred_fallthru
      _
    // Predicated region
    $region58: #{fused_forward.1} parent=1 // pred_check
      _
    $region59: #{fused_forward.1} parent=1 // pred_check_branch
      %1169 = sbr.rel (0) target = $region61
    $region60: #{fused_forward.1} parent=1 // pred_region
      %s1171 = ssub.s32 128, 128
      %1172 = vsyncadd [#allocation9], %s1171
      %s1174 = sshll.u32 [#allocation10], 4
      %s1175 = int_to_ptr.vmem [resolvable:$true] %s1174
      %1177 = dma.vmem_to_hbm [thread:$0]  %s1175, 128, %s12, [#allocation9]
    $region61: #{fused_forward.1} parent=1 // pred_fallthru
      _
    // Predicated region
    $region62: #{fused_forward.1} parent=1 // pred_check
      _
    $region63: #{fused_forward.1} parent=1 // pred_check_branch
      %1179 = sbr.rel (0) target = $region65
    $region64: #{fused_forward.1} parent=1 // pred_region
      %s1181 = ssub.s32 16, 16
      %1182 = vsyncadd [#allocation12], %s1181
      %s1184 = sshll.u32 [#allocation11], 4
      %s1185 = int_to_ptr.vmem [resolvable:$true] %s1184
      %1187 = dma.vmem_to_hbm [thread:$0]  %s1185, 16, %s13, [#allocation12]
    $region65: #{fused_forward.1} parent=1 // pred_fallthru
      _
    // Predicated region
    $region66: #{fused_forward.1} parent=1 // pred_check
      _
    $region67: #{fused_forward.1} parent=1 // pred_check_branch
      %1189 = sbr.rel (0) target = $region69
    $region68: #{fused_forward.1} parent=1 // pred_region
      %s1191 = ssub.s32 16, 16
      %1192 = vsyncadd [#allocation12], %s1191
      %s1194 = sshll.u32 [#allocation13], 4
      %s1195 = int_to_ptr.vmem [resolvable:$true] %s1194
      %1197 = dma.vmem_to_hbm [thread:$0]  %s1195, 16, %s14, [#allocation12]
    $region69: #{fused_forward.1} parent=1 // pred_fallthru
      _
    // Predicated region
    $region70: #{fused_forward.1} parent=1 // pred_check
      _
    $region71: #{fused_forward.1} parent=1 // pred_check_branch
      %1199 = sbr.rel (0) target = $region73
    $region72: #{fused_forward.1} parent=1 // pred_region
      _
    $region73: #{fused_forward.1} parent=1 // pred_fallthru
      _
    // Predicated region
    $region74: #{fused_forward.1} parent=1 // pred_check
      _
    $region75: #{fused_forward.1} parent=1 // pred_check_branch
      %1201 = sbr.rel (0) target = $region77
    $region76: #{fused_forward.1} parent=1 // pred_region
      _
    $region77: #{fused_forward.1} parent=1 // pred_fallthru
      _
    // Predicated region
    $region78: #{fused_forward.1} parent=1 // pred_check
      _
    $region79: #{fused_forward.1} parent=1 // pred_check_branch
      %1203 = sbr.rel (0) target = $region81
    $region80: #{fused_forward.1} parent=1 // pred_region
      _
    $region81: #{fused_forward.1} parent=1 // pred_fallthru
      _
    // Predicated region
    $region82: #{fused_forward.1} parent=1 // pred_check
      _
    $region83: #{fused_forward.1} parent=1 // pred_check_branch
      %1205 = sbr.rel (0) target = $region85
    $region84: #{fused_forward.1} parent=1 // pred_region
      _
    $region85: #{fused_forward.1} parent=1 // pred_fallthru
      _
    // Predicated region
    $region86: #{fused_forward.1} parent=1 // pred_check
      _
    $region87: #{fused_forward.1} parent=1 // pred_check_branch
      %1207 = sbr.rel (0) target = $region89
    $region88: #{fused_forward.1} parent=1 // pred_region
      %1208 = dma.done [#allocation4], 128
    $region89: #{fused_forward.1} parent=1 // pred_fallthru
      _
    // Predicated region
    $region90: #{fused_forward.1} parent=1 // pred_check
      _
    $region91: #{fused_forward.1} parent=1 // pred_check_branch
      %1210 = sbr.rel (0) target = $region93
    $region92: #{fused_forward.1} parent=1 // pred_region
      %1211 = dma.done [#allocation9], 128
    $region93: #{fused_forward.1} parent=1 // pred_fallthru
      _
    // Predicated region
    $region94: #{fused_forward.1} parent=1 // pred_check
      _
    $region95: #{fused_forward.1} parent=1 // pred_check_branch
      %1213 = sbr.rel (0) target = $region97
    $region96: #{fused_forward.1} parent=1 // pred_region
      %1214 = dma.done [#allocation9], 128
    $region97: #{fused_forward.1} parent=1 // pred_fallthru
      _
    // Predicated region
    $region98: #{fused_forward.1} parent=1 // pred_check
      _
    $region99: #{fused_forward.1} parent=1 // pred_check_branch
      %1216 = sbr.rel (0) target = $region101
    $region100: #{fused_forward.1} parent=1 // pred_region
      %1217 = dma.done [#allocation12], 16
    $region101: #{fused_forward.1} parent=1 // pred_fallthru
      _
    // Predicated region
    $region102: #{fused_forward.1} parent=1 // pred_check
      _
    $region103: #{fused_forward.1} parent=1 // pred_check_branch
      %1219 = sbr.rel (0) target = $region105
    $region104: #{fused_forward.1} parent=1 // pred_region
      %1220 = dma.done [#allocation12], 16
    $region105: #{fused_forward.1} parent=1 // pred_fallthru
      _
    %1221 = vsyncpa [#allocation3], 1
    %1222 = vsyncpa [#allocation6], 1
    %1223 = vsyncpa [#allocation4], 1
    %1224 = vsyncpa [#allocation9], 1
    %1225 = vsyncpa [#allocation12], 1

</llo_original>
